<compile_context>
chip_gen: v6e
topology: v6e:2x2x1
jax: 0.10.0
libtpu: 0.0.40
codegen_flags: <defaults>
</compile_context>

<pallas_src>
import functools

import jax
import jax.numpy as jnp
import numpy as np
from jax.experimental import pallas as pl
from jax.experimental.pallas import tpu as pltpu


def _round_up(x, m):
    return (x + m - 1) // m * m


def _default_use_bf16():
    """bf16 recurrent weights pay off on v6e/v7x MXUs; keep f32 on v5e and older."""
    try:
        kind = jax.devices()[0].device_kind.lower()
    except Exception:  # pragma: no cover - defensive
        return False
    return ("v6" in kind) or ("v7" in kind) or ("trillium" in kind)


def _lstm_exog_kernel(gx_ref, whh_ref, wfh_ref, exog_ref, wfe_ref,
                      out_ref, h_scr, c_scr, *, seq_len, chunk, needs_mask):
    """One sequence chunk of the LSTM recurrence (+ fused FC epilogue on last chunk).

    gx_ref  : (Tc, Bp, 4*Hp) f32   precomputed x_t @ W_ih^T + (b_ih + b_hh), padded
    whh_ref : (Hp, 4*Hp)     f32/bf16  padded W_hh^T (constant block -> VMEM-resident)
    wfh_ref : (1, Hp)        f32   fc weight row (hidden part)
    exog_ref: (Bp, Ep)       f32   padded exog (+ ones column carrying fc bias)
    wfe_ref : (1, Ep)        f32   fc weight row (exog part, + fc bias column)
    out_ref : (Bp, 1)        f32
    h_scr/c_scr : (Bp, Hp)   f32   recurrent state carried across grid steps
    """
    chunk_id = pl.program_id(0)
    Hp = whh_ref.shape[0]

    @pl.when(chunk_id == 0)
    def _init():
        h_scr[...] = jnp.zeros_like(h_scr)
        c_scr[...] = jnp.zeros_like(c_scr)

    # Load the recurrent weight once per chunk; the block index is constant so the
    # tile is not re-DMA'd across chunks.
    whh = whh_ref[...]
    mm_dtype = whh.dtype

    def step(t, carry):
        h, c = carry
        # Only the (8 x Hp) @ (Hp x 4Hp) recurrent matmul is on the serial path.
        gates = gx_ref[t] + jnp.dot(h.astype(mm_dtype), whh,
                                    preferred_element_type=jnp.float32)
        # 128-lane-aligned gate slices (Hp multiple of 128): whole-vreg views.
        i_g = jax.nn.sigmoid(gates[:, 0 * Hp:1 * Hp])
        f_g = jax.nn.sigmoid(gates[:, 1 * Hp:2 * Hp])
        g_g = jnp.tanh(gates[:, 2 * Hp:3 * Hp])
        o_g = jax.nn.sigmoid(gates[:, 3 * Hp:4 * Hp])
        c_new = f_g * c + i_g * g_g
        h_new = o_g * jnp.tanh(c_new)
        if needs_mask:
            # Padded timesteps in the last chunk: keep previous state.
            m = ((chunk_id * chunk + t) < seq_len).astype(jnp.float32)
            h_new = m * h_new + (1.0 - m) * h
            c_new = m * c_new + (1.0 - m) * c
        return (h_new, c_new)

    # Bounded unroll: `chunk` is small (<= seq_chunk), so full unroll of the chunk
    # keeps the LLO scheduler busy without blowing up instruction memory for big S.
    h_last, c_last = jax.lax.fori_loop(0, chunk, step,
                                       (h_scr[...], c_scr[...]), unroll=True)
    h_scr[...] = h_last
    c_scr[...] = c_last

    @pl.when(chunk_id == pl.num_programs(0) - 1)
    def _epilogue():
        # fc on VPU/XLU: elementwise mul + cross-lane reduce (no 1-column MXU matmul).
        # fc bias rides in as the ones-column of exog_ref times wfe_ref.
        y = (jnp.sum(h_last * wfh_ref[...], axis=-1, keepdims=True)
             + jnp.sum(exog_ref[...] * wfe_ref[...], axis=-1, keepdims=True))
        out_ref[...] = y.astype(out_ref.dtype)


def lstm_exog_forward(x, exog, params, *, seq_chunk=16, use_bf16_whh=None):
    """x: (B, S, input_size) batch_first (PyTorch convention); exog: (B, exog_size)."""
    W_ih, W_hh, b_ih, b_hh, W_fc, b_fc = params
    B, S, I = x.shape
    E = exog.shape[1]
    H = W_ih.shape[0] // 4

    if use_bf16_whh is None:
        use_bf16_whh = _default_use_bf16()

    Bp = _round_up(B, 8)          # sublane multiple
    Hp = _round_up(H, 128)        # lane multiple -> vreg-aligned gate slices
    Ep = _round_up(E + 1, 128)    # +1 column carries the fc bias

    Tc = min(seq_chunk, S)
    n_chunks = pl.cdiv(S, Tc)
    S_pad = n_chunks * Tc

    f32 = jnp.float32

    # Padded input-projection weights / folded biases, laid out per gate block of
    # Hp lanes so gx gate slices are 128-lane aligned.
    wih_p = jnp.zeros((4, Hp, I), f32).at[:, :H, :].set(
        W_ih.astype(f32).reshape(4, H, I)).reshape(4 * Hp, I)
    b_p = jnp.zeros((4, Hp), f32).at[:, :H].set(
        (b_ih + b_hh).astype(f32).reshape(4, H)).reshape(4 * Hp)

    # Input projection for every timestep at once (outside the serial recurrence).
    gx = jnp.einsum('bsi,gi->sbg', x.astype(f32), wih_p) + b_p        # (S, B, 4*Hp)
    gx = jnp.pad(gx, ((0, S_pad - S), (0, Bp - B), (0, 0)))           # (S_pad, Bp, 4*Hp)

    # Padded recurrent weight W_hh^T -> (Hp, 4*Hp).  Padded rows/cols are zero, so
    # padded lanes of h/c stay exactly 0 throughout the recurrence.
    whh_p = jnp.zeros((Hp, 4, Hp), f32).at[:H, :, :H].set(
        W_hh.T.astype(f32).reshape(H, 4, H)).reshape(Hp, 4 * Hp)
    if use_bf16_whh:
        whh_p = whh_p.astype(jnp.bfloat16)

    # concat(h, exog) @ W_fc^T + b_fc == h @ W_fc[:, :H]^T + exog' @ W_fc'^T, where
    # exog' has an extra ones-column and W_fc' the bias in that column.
    wfh_p = jnp.zeros((1, Hp), f32).at[:, :H].set(W_fc[:, :H].astype(f32))
    wfe_p = jnp.zeros((1, Ep), f32).at[:, :E].set(W_fc[:, H:].astype(f32))
    wfe_p = wfe_p.at[:, E].set(b_fc.astype(f32)[0])
    exog_p = jnp.zeros((Bp, Ep), f32).at[:B, :E].set(exog.astype(f32))
    exog_p = exog_p.at[:, E].set(1.0)

    kernel = functools.partial(_lstm_exog_kernel,
                               seq_len=S, chunk=Tc, needs_mask=(S_pad != S))

    out = pl.pallas_call(
        kernel,
        out_shape=jax.ShapeDtypeStruct((Bp, 1), jnp.float32),
        grid_spec=pltpu.PrefetchScalarGridSpec(
            num_scalar_prefetch=0,
            grid=(n_chunks,),
            in_specs=[
                pl.BlockSpec((Tc, Bp, 4 * Hp), lambda c: (c, 0, 0)),   # gx chunk
                pl.BlockSpec((Hp, 4 * Hp), lambda c: (0, 0)),          # W_hh^T
                pl.BlockSpec((1, Hp), lambda c: (0, 0)),               # fc (hidden)
                pl.BlockSpec((Bp, Ep), lambda c: (0, 0)),              # exog (+bias col)
                pl.BlockSpec((1, Ep), lambda c: (0, 0)),               # fc (exog+bias)
            ],
            out_specs=pl.BlockSpec((Bp, 1), lambda c: (0, 0)),
            scratch_shapes=[pltpu.VMEM((Bp, Hp), jnp.float32),         # h carry
                            pltpu.VMEM((Bp, Hp), jnp.float32)],        # c carry
        ),
        compiler_params=pltpu.CompilerParams(
            dimension_semantics=("arbitrary",)),                       # serial in time
    )(gx, whh_p, wfh_p, exog_p, wfe_p)
    return out[:B]


def ref_forward(x, exog, params):
    """Pure-JAX reference matching PyTorch LSTMExogModel.forward."""
    W_ih, W_hh, b_ih, b_hh, W_fc, b_fc = params
    B = x.shape[0]
    H = W_hh.shape[1]

    def step(carry, x_t):
        h, c = carry
        gates = x_t @ W_ih.T + b_ih + h @ W_hh.T + b_hh
        i, f, g, o = jnp.split(gates, 4, axis=-1)
        i, f, o = jax.nn.sigmoid(i), jax.nn.sigmoid(f), jax.nn.sigmoid(o)
        g = jnp.tanh(g)
        c = f * c + i * g
        h = o * jnp.tanh(c)
        return (h, c), h

    h0 = jnp.zeros((B, H), jnp.float32)
    c0 = jnp.zeros((B, H), jnp.float32)
    (h_last, _), _ = jax.lax.scan(step, (h0, c0), jnp.transpose(x, (1, 0, 2)))
    cat = jnp.concatenate([h_last, exog], axis=1)
    return cat @ W_fc.T + b_fc


def init_params(key, input_size, exog_size, hidden_size):
    """Deterministic init mimicking PyTorch uniform(-1/sqrt(H), 1/sqrt(H))."""
    k = 1.0 / np.sqrt(hidden_size)
    ks = jax.random.split(key, 6)
    W_ih = jax.random.uniform(ks[0], (4 * hidden_size, input_size), jnp.float32, -k, k)
    W_hh = jax.random.uniform(ks[1], (4 * hidden_size, hidden_size), jnp.float32, -k, k)
    b_ih = jax.random.uniform(ks[2], (4 * hidden_size,), jnp.float32, -k, k)
    b_hh = jax.random.uniform(ks[3], (4 * hidden_size,), jnp.float32, -k, k)
    kf = 1.0 / np.sqrt(hidden_size + exog_size)
    W_fc = jax.random.uniform(ks[4], (1, hidden_size + exog_size), jnp.float32, -kf, kf)
    b_fc = jax.random.uniform(ks[5], (1,), jnp.float32, -kf, kf)
    return (W_ih, W_hh, b_ih, b_hh, W_fc, b_fc)


if __name__ == "__main__":
    batch, seq, input_size, exog_size, hidden_size = 4, 8, 1, 4, 50

    key = jax.random.PRNGKey(0)
    kx, ke, kp = jax.random.split(key, 3)
    x = jax.random.normal(kx, (batch, seq, input_size), jnp.float32)
    exog = jax.random.normal(ke, (batch, exog_size), jnp.float32)
    params = init_params(kp, input_size, exog_size, hidden_size)

    # Test 1: f32 recurrent weights, single chunk -> exact-math check, tight tol.
    out = jax.block_until_ready(
        lstm_exog_forward(x, exog, params, use_bf16_whh=False))
    ref = ref_forward(x, exog, params)
    np.testing.assert_allclose(np.asarray(out), np.asarray(ref), rtol=1e-5, atol=1e-5)

    # Test 2: multi-chunk grid + remainder masking, with bf16 recurrent weights
    # auto-enabled on v6e/v7x (looser tolerance when bf16 is in play).
    seq2 = 13
    x2 = jax.random.normal(jax.random.PRNGKey(1), (batch, seq2, input_size),
                           jnp.float32)
    bf16 = _default_use_bf16()
    out2 = jax.block_until_ready(
        lstm_exog_forward(x2, exog, params, seq_chunk=8))
    ref2 = ref_forward(x2, exog, params)
    tol = 2e-2 if bf16 else 1e-5
    np.testing.assert_allclose(np.asarray(out2), np.asarray(ref2), rtol=tol, atol=tol)

    print("KERNEL_OK")
</pallas_src>

<mosaic_0001>
module attributes {stable_mosaic.version = 11 : i64} {
  func.func @_lstm_exog_kernel(%arg0: i32, %arg1: memref<8x8x512xf32, #tpu.memory_space<vmem>>, %arg2: memref<128x512xf32, #tpu.memory_space<vmem>>, %arg3: memref<1x128xf32, #tpu.memory_space<vmem>>, %arg4: memref<8x128xf32, #tpu.memory_space<vmem>>, %arg5: memref<1x128xf32, #tpu.memory_space<vmem>>, %arg6: memref<8x1xf32, #tpu.memory_space<vmem>>, %arg7: memref<8x128xf32, #tpu.memory_space<vmem>>, %arg8: memref<8x128xf32, #tpu.memory_space<vmem>>) attributes {dimension_semantics = [#tpu.dimension_semantics<arbitrary>], iteration_bounds = array<i64: 1>, scalar_prefetch = 0 : i64, scratch_operands = 2 : i64, tpu.core_type = #tpu.core_type<tc>, window_params = [{transform_indices = @transform_0, window_bounds = array<i64: 8, 8, 512>}, {pipeline_mode = #tpu.pipeline_mode<synchronous>, transform_indices = @transform_1, window_bounds = array<i64: 128, 512>}, {pipeline_mode = #tpu.pipeline_mode<synchronous>, transform_indices = @transform_2, window_bounds = array<i64: 1, 128>}, {pipeline_mode = #tpu.pipeline_mode<synchronous>, transform_indices = @transform_3, window_bounds = array<i64: 8, 128>}, {pipeline_mode = #tpu.pipeline_mode<synchronous>, transform_indices = @transform_4, window_bounds = array<i64: 1, 128>}, {pipeline_mode = #tpu.pipeline_mode<synchronous>, transform_indices = @transform_5, window_bounds = array<i64: 8, 1>}]} {
    %c0_i32 = arith.constant 0 : i32
    %0 = arith.cmpi eq, %arg0, %c0_i32 : i32
    %1 = arith.extui %0 : i1 to i32
    %c0_i32_0 = arith.constant 0 : i32
    %2 = arith.cmpi ne, %1, %c0_i32_0 : i32
    scf.if %2 {
      %cst_60 = arith.constant 0.000000e+00 : f32
      %251 = vector.broadcast %cst_60 : f32 to vector<8x128xf32>
      %c0_61 = arith.constant 0 : index
      %c0_62 = arith.constant 0 : index
      %252 = vector.load %arg7[%c0_61, %c0_62] : memref<8x128xf32, #tpu.memory_space<vmem>>, vector<8x128xf32>
      tpu.vector_store %arg7[%c0_61, %c0_62], %251 {strides = array<i32>} : memref<8x128xf32, #tpu.memory_space<vmem>>, vector<8x128xf32>,
      %cst_63 = arith.constant 0.000000e+00 : f32
      %253 = vector.broadcast %cst_63 : f32 to vector<8x128xf32>
      %c0_64 = arith.constant 0 : index
      %c0_65 = arith.constant 0 : index
      %254 = vector.load %arg8[%c0_64, %c0_65] : memref<8x128xf32, #tpu.memory_space<vmem>>, vector<8x128xf32>
      tpu.vector_store %arg8[%c0_64, %c0_65], %253 {strides = array<i32>} : memref<8x128xf32, #tpu.memory_space<vmem>>, vector<8x128xf32>,
    } else {
    }
    %c0 = arith.constant 0 : index
    %c0_1 = arith.constant 0 : index
    %3 = vector.load %arg2[%c0, %c0_1] : memref<128x512xf32, #tpu.memory_space<vmem>>, vector<128x512xf32>
    %c0_2 = arith.constant 0 : index
    %c0_3 = arith.constant 0 : index
    %4 = vector.load %arg7[%c0_2, %c0_3] : memref<8x128xf32, #tpu.memory_space<vmem>>, vector<8x128xf32>
    %c0_4 = arith.constant 0 : index
    %c0_5 = arith.constant 0 : index
    %5 = vector.load %arg8[%c0_4, %c0_5] : memref<8x128xf32, #tpu.memory_space<vmem>>, vector<8x128xf32>
    %c0_i32_6 = arith.constant 0 : i32
    %6 = arith.index_cast %c0_i32_6 : i32 to index
    %c0_7 = arith.constant 0 : index
    %c0_8 = arith.constant 0 : index
    %7 = vector.load %arg1[%6, %c0_7, %c0_8] : memref<8x8x512xf32, #tpu.memory_space<vmem>>, vector<1x8x512xf32>
    %8 = vector.shape_cast %7 : vector<1x8x512xf32> to vector<8x512xf32>
    %cst = arith.constant dense<0.000000e+00> : vector<8x512xf32>
    %9 = tpu.matmul %4, %3, %cst {dimension_numbers = #tpu.dot_dimension_numbers<[1], [0], [0], [1], [0, 0, 1, 1], [], []>} : vector<8x128xf32>, vector<128x512xf32>, vector<8x512xf32> -> vector<8x512xf32>
    %10 = arith.addf %8, %9 : vector<8x512xf32>
    %11 = vector.extract_strided_slice %10 {offsets = [0, 0], sizes = [8, 128], strides = [1, 1]} : vector<8x512xf32> to vector<8x128xf32>
    %12 = arith.negf %11 : vector<8x128xf32>
    %13 = math.exp %12 : vector<8x128xf32>
    %cst_9 = arith.constant 1.000000e+00 : f32
    %14 = vector.broadcast %cst_9 : f32 to vector<8x128xf32>
    %15 = arith.addf %14, %13 : vector<8x128xf32>
    %16 = arith.divf %14, %15 : vector<8x128xf32>
    %17 = vector.extract_strided_slice %10 {offsets = [0, 128], sizes = [8, 128], strides = [1, 1]} : vector<8x512xf32> to vector<8x128xf32>
    %18 = arith.negf %17 : vector<8x128xf32>
    %19 = math.exp %18 : vector<8x128xf32>
    %cst_10 = arith.constant 1.000000e+00 : f32
    %20 = vector.broadcast %cst_10 : f32 to vector<8x128xf32>
    %21 = arith.addf %20, %19 : vector<8x128xf32>
    %22 = arith.divf %20, %21 : vector<8x128xf32>
    %23 = vector.extract_strided_slice %10 {offsets = [0, 256], sizes = [8, 128], strides = [1, 1]} : vector<8x512xf32> to vector<8x128xf32>
    %24 = math.tanh %23 : vector<8x128xf32>
    %25 = vector.extract_strided_slice %10 {offsets = [0, 384], sizes = [8, 128], strides = [1, 1]} : vector<8x512xf32> to vector<8x128xf32>
    %26 = arith.negf %25 : vector<8x128xf32>
    %27 = math.exp %26 : vector<8x128xf32>
    %cst_11 = arith.constant 1.000000e+00 : f32
    %28 = vector.broadcast %cst_11 : f32 to vector<8x128xf32>
    %29 = arith.addf %28, %27 : vector<8x128xf32>
    %30 = arith.divf %28, %29 : vector<8x128xf32>
    %31 = arith.mulf %22, %5 : vector<8x128xf32>
    %32 = arith.mulf %16, %24 : vector<8x128xf32>
    %33 = arith.addf %31, %32 : vector<8x128xf32>
    %34 = math.tanh %33 : vector<8x128xf32>
    %35 = arith.mulf %30, %34 : vector<8x128xf32>
    %c1_i32 = arith.constant 1 : i32
    %36 = arith.index_cast %c1_i32 : i32 to index
    %c0_12 = arith.constant 0 : index
    %c0_13 = arith.constant 0 : index
    %37 = vector.load %arg1[%36, %c0_12, %c0_13] : memref<8x8x512xf32, #tpu.memory_space<vmem>>, vector<1x8x512xf32>
    %38 = vector.shape_cast %37 : vector<1x8x512xf32> to vector<8x512xf32>
    %cst_14 = arith.constant dense<0.000000e+00> : vector<8x512xf32>
    %39 = tpu.matmul %35, %3, %cst_14 {dimension_numbers = #tpu.dot_dimension_numbers<[1], [0], [0], [1], [0, 0, 1, 1], [], []>} : vector<8x128xf32>, vector<128x512xf32>, vector<8x512xf32> -> vector<8x512xf32>
    %40 = arith.addf %38, %39 : vector<8x512xf32>
    %41 = vector.extract_strided_slice %40 {offsets = [0, 0], sizes = [8, 128], strides = [1, 1]} : vector<8x512xf32> to vector<8x128xf32>
    %42 = arith.negf %41 : vector<8x128xf32>
    %43 = math.exp %42 : vector<8x128xf32>
    %cst_15 = arith.constant 1.000000e+00 : f32
    %44 = vector.broadcast %cst_15 : f32 to vector<8x128xf32>
    %45 = arith.addf %44, %43 : vector<8x128xf32>
    %46 = arith.divf %44, %45 : vector<8x128xf32>
    %47 = vector.extract_strided_slice %40 {offsets = [0, 128], sizes = [8, 128], strides = [1, 1]} : vector<8x512xf32> to vector<8x128xf32>
    %48 = arith.negf %47 : vector<8x128xf32>
    %49 = math.exp %48 : vector<8x128xf32>
    %cst_16 = arith.constant 1.000000e+00 : f32
    %50 = vector.broadcast %cst_16 : f32 to vector<8x128xf32>
    %51 = arith.addf %50, %49 : vector<8x128xf32>
    %52 = arith.divf %50, %51 : vector<8x128xf32>
    %53 = vector.extract_strided_slice %40 {offsets = [0, 256], sizes = [8, 128], strides = [1, 1]} : vector<8x512xf32> to vector<8x128xf32>
    %54 = math.tanh %53 : vector<8x128xf32>
    %55 = vector.extract_strided_slice %40 {offsets = [0, 384], sizes = [8, 128], strides = [1, 1]} : vector<8x512xf32> to vector<8x128xf32>
    %56 = arith.negf %55 : vector<8x128xf32>
    %57 = math.exp %56 : vector<8x128xf32>
    %cst_17 = arith.constant 1.000000e+00 : f32
    %58 = vector.broadcast %cst_17 : f32 to vector<8x128xf32>
    %59 = arith.addf %58, %57 : vector<8x128xf32>
    %60 = arith.divf %58, %59 : vector<8x128xf32>
    %61 = arith.mulf %52, %33 : vector<8x128xf32>
    %62 = arith.mulf %46, %54 : vector<8x128xf32>
    %63 = arith.addf %61, %62 : vector<8x128xf32>
    %64 = math.tanh %63 : vector<8x128xf32>
    %65 = arith.mulf %60, %64 : vector<8x128xf32>
    %c2_i32 = arith.constant 2 : i32
    %66 = arith.index_cast %c2_i32 : i32 to index
    %c0_18 = arith.constant 0 : index
    %c0_19 = arith.constant 0 : index
    %67 = vector.load %arg1[%66, %c0_18, %c0_19] : memref<8x8x512xf32, #tpu.memory_space<vmem>>, vector<1x8x512xf32>
    %68 = vector.shape_cast %67 : vector<1x8x512xf32> to vector<8x512xf32>
    %cst_20 = arith.constant dense<0.000000e+00> : vector<8x512xf32>
    %69 = tpu.matmul %65, %3, %cst_20 {dimension_numbers = #tpu.dot_dimension_numbers<[1], [0], [0], [1], [0, 0, 1, 1], [], []>} : vector<8x128xf32>, vector<128x512xf32>, vector<8x512xf32> -> vector<8x512xf32>
    %70 = arith.addf %68, %69 : vector<8x512xf32>
    %71 = vector.extract_strided_slice %70 {offsets = [0, 0], sizes = [8, 128], strides = [1, 1]} : vector<8x512xf32> to vector<8x128xf32>
    %72 = arith.negf %71 : vector<8x128xf32>
    %73 = math.exp %72 : vector<8x128xf32>
    %cst_21 = arith.constant 1.000000e+00 : f32
    %74 = vector.broadcast %cst_21 : f32 to vector<8x128xf32>
    %75 = arith.addf %74, %73 : vector<8x128xf32>
    %76 = arith.divf %74, %75 : vector<8x128xf32>
    %77 = vector.extract_strided_slice %70 {offsets = [0, 128], sizes = [8, 128], strides = [1, 1]} : vector<8x512xf32> to vector<8x128xf32>
    %78 = arith.negf %77 : vector<8x128xf32>
    %79 = math.exp %78 : vector<8x128xf32>
    %cst_22 = arith.constant 1.000000e+00 : f32
    %80 = vector.broadcast %cst_22 : f32 to vector<8x128xf32>
    %81 = arith.addf %80, %79 : vector<8x128xf32>
    %82 = arith.divf %80, %81 : vector<8x128xf32>
    %83 = vector.extract_strided_slice %70 {offsets = [0, 256], sizes = [8, 128], strides = [1, 1]} : vector<8x512xf32> to vector<8x128xf32>
    %84 = math.tanh %83 : vector<8x128xf32>
    %85 = vector.extract_strided_slice %70 {offsets = [0, 384], sizes = [8, 128], strides = [1, 1]} : vector<8x512xf32> to vector<8x128xf32>
    %86 = arith.negf %85 : vector<8x128xf32>
    %87 = math.exp %86 : vector<8x128xf32>
    %cst_23 = arith.constant 1.000000e+00 : f32
    %88 = vector.broadcast %cst_23 : f32 to vector<8x128xf32>
    %89 = arith.addf %88, %87 : vector<8x128xf32>
    %90 = arith.divf %88, %89 : vector<8x128xf32>
    %91 = arith.mulf %82, %63 : vector<8x128xf32>
    %92 = arith.mulf %76, %84 : vector<8x128xf32>
    %93 = arith.addf %91, %92 : vector<8x128xf32>
    %94 = math.tanh %93 : vector<8x128xf32>
    %95 = arith.mulf %90, %94 : vector<8x128xf32>
    %c3_i32 = arith.constant 3 : i32
    %96 = arith.index_cast %c3_i32 : i32 to index
    %c0_24 = arith.constant 0 : index
    %c0_25 = arith.constant 0 : index
    %97 = vector.load %arg1[%96, %c0_24, %c0_25] : memref<8x8x512xf32, #tpu.memory_space<vmem>>, vector<1x8x512xf32>
    %98 = vector.shape_cast %97 : vector<1x8x512xf32> to vector<8x512xf32>
    %cst_26 = arith.constant dense<0.000000e+00> : vector<8x512xf32>
    %99 = tpu.matmul %95, %3, %cst_26 {dimension_numbers = #tpu.dot_dimension_numbers<[1], [0], [0], [1], [0, 0, 1, 1], [], []>} : vector<8x128xf32>, vector<128x512xf32>, vector<8x512xf32> -> vector<8x512xf32>
    %100 = arith.addf %98, %99 : vector<8x512xf32>
    %101 = vector.extract_strided_slice %100 {offsets = [0, 0], sizes = [8, 128], strides = [1, 1]} : vector<8x512xf32> to vector<8x128xf32>
    %102 = arith.negf %101 : vector<8x128xf32>
    %103 = math.exp %102 : vector<8x128xf32>
    %cst_27 = arith.constant 1.000000e+00 : f32
    %104 = vector.broadcast %cst_27 : f32 to vector<8x128xf32>
    %105 = arith.addf %104, %103 : vector<8x128xf32>
    %106 = arith.divf %104, %105 : vector<8x128xf32>
    %107 = vector.extract_strided_slice %100 {offsets = [0, 128], sizes = [8, 128], strides = [1, 1]} : vector<8x512xf32> to vector<8x128xf32>
    %108 = arith.negf %107 : vector<8x128xf32>
    %109 = math.exp %108 : vector<8x128xf32>
    %cst_28 = arith.constant 1.000000e+00 : f32
    %110 = vector.broadcast %cst_28 : f32 to vector<8x128xf32>
    %111 = arith.addf %110, %109 : vector<8x128xf32>
    %112 = arith.divf %110, %111 : vector<8x128xf32>
    %113 = vector.extract_strided_slice %100 {offsets = [0, 256], sizes = [8, 128], strides = [1, 1]} : vector<8x512xf32> to vector<8x128xf32>
    %114 = math.tanh %113 : vector<8x128xf32>
    %115 = vector.extract_strided_slice %100 {offsets = [0, 384], sizes = [8, 128], strides = [1, 1]} : vector<8x512xf32> to vector<8x128xf32>
    %116 = arith.negf %115 : vector<8x128xf32>
    %117 = math.exp %116 : vector<8x128xf32>
    %cst_29 = arith.constant 1.000000e+00 : f32
    %118 = vector.broadcast %cst_29 : f32 to vector<8x128xf32>
    %119 = arith.addf %118, %117 : vector<8x128xf32>
    %120 = arith.divf %118, %119 : vector<8x128xf32>
    %121 = arith.mulf %112, %93 : vector<8x128xf32>
    %122 = arith.mulf %106, %114 : vector<8x128xf32>
    %123 = arith.addf %121, %122 : vector<8x128xf32>
    %124 = math.tanh %123 : vector<8x128xf32>
    %125 = arith.mulf %120, %124 : vector<8x128xf32>
    %c4_i32 = arith.constant 4 : i32
    %126 = arith.index_cast %c4_i32 : i32 to index
    %c0_30 = arith.constant 0 : index
    %c0_31 = arith.constant 0 : index
    %127 = vector.load %arg1[%126, %c0_30, %c0_31] : memref<8x8x512xf32, #tpu.memory_space<vmem>>, vector<1x8x512xf32>
    %128 = vector.shape_cast %127 : vector<1x8x512xf32> to vector<8x512xf32>
    %cst_32 = arith.constant dense<0.000000e+00> : vector<8x512xf32>
    %129 = tpu.matmul %125, %3, %cst_32 {dimension_numbers = #tpu.dot_dimension_numbers<[1], [0], [0], [1], [0, 0, 1, 1], [], []>} : vector<8x128xf32>, vector<128x512xf32>, vector<8x512xf32> -> vector<8x512xf32>
    %130 = arith.addf %128, %129 : vector<8x512xf32>
    %131 = vector.extract_strided_slice %130 {offsets = [0, 0], sizes = [8, 128], strides = [1, 1]} : vector<8x512xf32> to vector<8x128xf32>
    %132 = arith.negf %131 : vector<8x128xf32>
    %133 = math.exp %132 : vector<8x128xf32>
    %cst_33 = arith.constant 1.000000e+00 : f32
    %134 = vector.broadcast %cst_33 : f32 to vector<8x128xf32>
    %135 = arith.addf %134, %133 : vector<8x128xf32>
    %136 = arith.divf %134, %135 : vector<8x128xf32>
    %137 = vector.extract_strided_slice %130 {offsets = [0, 128], sizes = [8, 128], strides = [1, 1]} : vector<8x512xf32> to vector<8x128xf32>
    %138 = arith.negf %137 : vector<8x128xf32>
    %139 = math.exp %138 : vector<8x128xf32>
    %cst_34 = arith.constant 1.000000e+00 : f32
    %140 = vector.broadcast %cst_34 : f32 to vector<8x128xf32>
    %141 = arith.addf %140, %139 : vector<8x128xf32>
    %142 = arith.divf %140, %141 : vector<8x128xf32>
    %143 = vector.extract_strided_slice %130 {offsets = [0, 256], sizes = [8, 128], strides = [1, 1]} : vector<8x512xf32> to vector<8x128xf32>
    %144 = math.tanh %143 : vector<8x128xf32>
    %145 = vector.extract_strided_slice %130 {offsets = [0, 384], sizes = [8, 128], strides = [1, 1]} : vector<8x512xf32> to vector<8x128xf32>
    %146 = arith.negf %145 : vector<8x128xf32>
    %147 = math.exp %146 : vector<8x128xf32>
    %cst_35 = arith.constant 1.000000e+00 : f32
    %148 = vector.broadcast %cst_35 : f32 to vector<8x128xf32>
    %149 = arith.addf %148, %147 : vector<8x128xf32>
    %150 = arith.divf %148, %149 : vector<8x128xf32>
    %151 = arith.mulf %142, %123 : vector<8x128xf32>
    %152 = arith.mulf %136, %144 : vector<8x128xf32>
    %153 = arith.addf %151, %152 : vector<8x128xf32>
    %154 = math.tanh %153 : vector<8x128xf32>
    %155 = arith.mulf %150, %154 : vector<8x128xf32>
    %c5_i32 = arith.constant 5 : i32
    %156 = arith.index_cast %c5_i32 : i32 to index
    %c0_36 = arith.constant 0 : index
    %c0_37 = arith.constant 0 : index
    %157 = vector.load %arg1[%156, %c0_36, %c0_37] : memref<8x8x512xf32, #tpu.memory_space<vmem>>, vector<1x8x512xf32>
    %158 = vector.shape_cast %157 : vector<1x8x512xf32> to vector<8x512xf32>
    %cst_38 = arith.constant dense<0.000000e+00> : vector<8x512xf32>
    %159 = tpu.matmul %155, %3, %cst_38 {dimension_numbers = #tpu.dot_dimension_numbers<[1], [0], [0], [1], [0, 0, 1, 1], [], []>} : vector<8x128xf32>, vector<128x512xf32>, vector<8x512xf32> -> vector<8x512xf32>
    %160 = arith.addf %158, %159 : vector<8x512xf32>
    %161 = vector.extract_strided_slice %160 {offsets = [0, 0], sizes = [8, 128], strides = [1, 1]} : vector<8x512xf32> to vector<8x128xf32>
    %162 = arith.negf %161 : vector<8x128xf32>
    %163 = math.exp %162 : vector<8x128xf32>
    %cst_39 = arith.constant 1.000000e+00 : f32
    %164 = vector.broadcast %cst_39 : f32 to vector<8x128xf32>
    %165 = arith.addf %164, %163 : vector<8x128xf32>
    %166 = arith.divf %164, %165 : vector<8x128xf32>
    %167 = vector.extract_strided_slice %160 {offsets = [0, 128], sizes = [8, 128], strides = [1, 1]} : vector<8x512xf32> to vector<8x128xf32>
    %168 = arith.negf %167 : vector<8x128xf32>
    %169 = math.exp %168 : vector<8x128xf32>
    %cst_40 = arith.constant 1.000000e+00 : f32
    %170 = vector.broadcast %cst_40 : f32 to vector<8x128xf32>
    %171 = arith.addf %170, %169 : vector<8x128xf32>
    %172 = arith.divf %170, %171 : vector<8x128xf32>
    %173 = vector.extract_strided_slice %160 {offsets = [0, 256], sizes = [8, 128], strides = [1, 1]} : vector<8x512xf32> to vector<8x128xf32>
    %174 = math.tanh %173 : vector<8x128xf32>
    %175 = vector.extract_strided_slice %160 {offsets = [0, 384], sizes = [8, 128], strides = [1, 1]} : vector<8x512xf32> to vector<8x128xf32>
    %176 = arith.negf %175 : vector<8x128xf32>
    %177 = math.exp %176 : vector<8x128xf32>
    %cst_41 = arith.constant 1.000000e+00 : f32
    %178 = vector.broadcast %cst_41 : f32 to vector<8x128xf32>
    %179 = arith.addf %178, %177 : vector<8x128xf32>
    %180 = arith.divf %178, %179 : vector<8x128xf32>
    %181 = arith.mulf %172, %153 : vector<8x128xf32>
    %182 = arith.mulf %166, %174 : vector<8x128xf32>
    %183 = arith.addf %181, %182 : vector<8x128xf32>
    %184 = math.tanh %183 : vector<8x128xf32>
    %185 = arith.mulf %180, %184 : vector<8x128xf32>
    %c6_i32 = arith.constant 6 : i32
    %186 = arith.index_cast %c6_i32 : i32 to index
    %c0_42 = arith.constant 0 : index
    %c0_43 = arith.constant 0 : index
    %187 = vector.load %arg1[%186, %c0_42, %c0_43] : memref<8x8x512xf32, #tpu.memory_space<vmem>>, vector<1x8x512xf32>
    %188 = vector.shape_cast %187 : vector<1x8x512xf32> to vector<8x512xf32>
    %cst_44 = arith.constant dense<0.000000e+00> : vector<8x512xf32>
    %189 = tpu.matmul %185, %3, %cst_44 {dimension_numbers = #tpu.dot_dimension_numbers<[1], [0], [0], [1], [0, 0, 1, 1], [], []>} : vector<8x128xf32>, vector<128x512xf32>, vector<8x512xf32> -> vector<8x512xf32>
    %190 = arith.addf %188, %189 : vector<8x512xf32>
    %191 = vector.extract_strided_slice %190 {offsets = [0, 0], sizes = [8, 128], strides = [1, 1]} : vector<8x512xf32> to vector<8x128xf32>
    %192 = arith.negf %191 : vector<8x128xf32>
    %193 = math.exp %192 : vector<8x128xf32>
    %cst_45 = arith.constant 1.000000e+00 : f32
    %194 = vector.broadcast %cst_45 : f32 to vector<8x128xf32>
    %195 = arith.addf %194, %193 : vector<8x128xf32>
    %196 = arith.divf %194, %195 : vector<8x128xf32>
    %197 = vector.extract_strided_slice %190 {offsets = [0, 128], sizes = [8, 128], strides = [1, 1]} : vector<8x512xf32> to vector<8x128xf32>
    %198 = arith.negf %197 : vector<8x128xf32>
    %199 = math.exp %198 : vector<8x128xf32>
    %cst_46 = arith.constant 1.000000e+00 : f32
    %200 = vector.broadcast %cst_46 : f32 to vector<8x128xf32>
    %201 = arith.addf %200, %199 : vector<8x128xf32>
    %202 = arith.divf %200, %201 : vector<8x128xf32>
    %203 = vector.extract_strided_slice %190 {offsets = [0, 256], sizes = [8, 128], strides = [1, 1]} : vector<8x512xf32> to vector<8x128xf32>
    %204 = math.tanh %203 : vector<8x128xf32>
    %205 = vector.extract_strided_slice %190 {offsets = [0, 384], sizes = [8, 128], strides = [1, 1]} : vector<8x512xf32> to vector<8x128xf32>
    %206 = arith.negf %205 : vector<8x128xf32>
    %207 = math.exp %206 : vector<8x128xf32>
    %cst_47 = arith.constant 1.000000e+00 : f32
    %208 = vector.broadcast %cst_47 : f32 to vector<8x128xf32>
    %209 = arith.addf %208, %207 : vector<8x128xf32>
    %210 = arith.divf %208, %209 : vector<8x128xf32>
    %211 = arith.mulf %202, %183 : vector<8x128xf32>
    %212 = arith.mulf %196, %204 : vector<8x128xf32>
    %213 = arith.addf %211, %212 : vector<8x128xf32>
    %214 = math.tanh %213 : vector<8x128xf32>
    %215 = arith.mulf %210, %214 : vector<8x128xf32>
    %c7_i32 = arith.constant 7 : i32
    %216 = arith.index_cast %c7_i32 : i32 to index
    %c0_48 = arith.constant 0 : index
    %c0_49 = arith.constant 0 : index
    %217 = vector.load %arg1[%216, %c0_48, %c0_49] : memref<8x8x512xf32, #tpu.memory_space<vmem>>, vector<1x8x512xf32>
    %218 = vector.shape_cast %217 : vector<1x8x512xf32> to vector<8x512xf32>
    %cst_50 = arith.constant dense<0.000000e+00> : vector<8x512xf32>
    %219 = tpu.matmul %215, %3, %cst_50 {dimension_numbers = #tpu.dot_dimension_numbers<[1], [0], [0], [1], [0, 0, 1, 1], [], []>} : vector<8x128xf32>, vector<128x512xf32>, vector<8x512xf32> -> vector<8x512xf32>
    %220 = arith.addf %218, %219 : vector<8x512xf32>
    %221 = vector.extract_strided_slice %220 {offsets = [0, 0], sizes = [8, 128], strides = [1, 1]} : vector<8x512xf32> to vector<8x128xf32>
    %222 = arith.negf %221 : vector<8x128xf32>
    %223 = math.exp %222 : vector<8x128xf32>
    %cst_51 = arith.constant 1.000000e+00 : f32
    %224 = vector.broadcast %cst_51 : f32 to vector<8x128xf32>
    %225 = arith.addf %224, %223 : vector<8x128xf32>
    %226 = arith.divf %224, %225 : vector<8x128xf32>
    %227 = vector.extract_strided_slice %220 {offsets = [0, 128], sizes = [8, 128], strides = [1, 1]} : vector<8x512xf32> to vector<8x128xf32>
    %228 = arith.negf %227 : vector<8x128xf32>
    %229 = math.exp %228 : vector<8x128xf32>
    %cst_52 = arith.constant 1.000000e+00 : f32
    %230 = vector.broadcast %cst_52 : f32 to vector<8x128xf32>
    %231 = arith.addf %230, %229 : vector<8x128xf32>
    %232 = arith.divf %230, %231 : vector<8x128xf32>
    %233 = vector.extract_strided_slice %220 {offsets = [0, 256], sizes = [8, 128], strides = [1, 1]} : vector<8x512xf32> to vector<8x128xf32>
    %234 = math.tanh %233 : vector<8x128xf32>
    %235 = vector.extract_strided_slice %220 {offsets = [0, 384], sizes = [8, 128], strides = [1, 1]} : vector<8x512xf32> to vector<8x128xf32>
    %236 = arith.negf %235 : vector<8x128xf32>
    %237 = math.exp %236 : vector<8x128xf32>
    %cst_53 = arith.constant 1.000000e+00 : f32
    %238 = vector.broadcast %cst_53 : f32 to vector<8x128xf32>
    %239 = arith.addf %238, %237 : vector<8x128xf32>
    %240 = arith.divf %238, %239 : vector<8x128xf32>
    %241 = arith.mulf %232, %213 : vector<8x128xf32>
    %242 = arith.mulf %226, %234 : vector<8x128xf32>
    %243 = arith.addf %241, %242 : vector<8x128xf32>
    %244 = math.tanh %243 : vector<8x128xf32>
    %245 = arith.mulf %240, %244 : vector<8x128xf32>
    %c8_i32 = arith.constant 8 : i32
    %c0_54 = arith.constant 0 : index
    %c0_55 = arith.constant 0 : index
    %246 = vector.load %arg7[%c0_54, %c0_55] : memref<8x128xf32, #tpu.memory_space<vmem>>, vector<8x128xf32>
    tpu.vector_store %arg7[%c0_54, %c0_55], %245 {strides = array<i32>} : memref<8x128xf32, #tpu.memory_space<vmem>>, vector<8x128xf32>,
    %c0_56 = arith.constant 0 : index
    %c0_57 = arith.constant 0 : index
    %247 = vector.load %arg8[%c0_56, %c0_57] : memref<8x128xf32, #tpu.memory_space<vmem>>, vector<8x128xf32>
    tpu.vector_store %arg8[%c0_56, %c0_57], %243 {strides = array<i32>} : memref<8x128xf32, #tpu.memory_space<vmem>>, vector<8x128xf32>,
    %c0_i32_58 = arith.constant 0 : i32
    %248 = arith.cmpi eq, %arg0, %c0_i32_58 : i32
    %249 = arith.extui %248 : i1 to i32
    %c0_i32_59 = arith.constant 0 : i32
    %250 = arith.cmpi ne, %249, %c0_i32_59 : i32
    scf.if %250 {
      %c0_60 = arith.constant 0 : index
      %c0_61 = arith.constant 0 : index
      %251 = vector.load %arg3[%c0_60, %c0_61] : memref<1x128xf32, #tpu.memory_space<vmem>>, vector<1x128xf32>
      %252 = vector.broadcast %251 : vector<1x128xf32> to vector<8x128xf32>
      %253 = arith.mulf %245, %252 : vector<8x128xf32>
      %cst_62 = arith.constant dense<0.000000e+00> : vector<8xf32>
      %254 = vector.multi_reduction <add>, %253, %cst_62 [1] : vector<8x128xf32> to vector<8xf32>
      %255 = vector.shape_cast %254 : vector<8xf32> to vector<8x1xf32>
      %c0_63 = arith.constant 0 : index
      %c0_64 = arith.constant 0 : index
      %256 = vector.load %arg4[%c0_63, %c0_64] : memref<8x128xf32, #tpu.memory_space<vmem>>, vector<8x128xf32>
      %c0_65 = arith.constant 0 : index
      %c0_66 = arith.constant 0 : index
      %257 = vector.load %arg5[%c0_65, %c0_66] : memref<1x128xf32, #tpu.memory_space<vmem>>, vector<1x128xf32>
      %258 = vector.broadcast %257 : vector<1x128xf32> to vector<8x128xf32>
      %259 = arith.mulf %256, %258 : vector<8x128xf32>
      %cst_67 = arith.constant dense<0.000000e+00> : vector<8xf32>
      %260 = vector.multi_reduction <add>, %259, %cst_67 [1] : vector<8x128xf32> to vector<8xf32>
      %261 = vector.shape_cast %260 : vector<8xf32> to vector<8x1xf32>
      %262 = arith.addf %255, %261 : vector<8x1xf32>
      %c0_68 = arith.constant 0 : index
      %c0_69 = arith.constant 0 : index
      %263 = vector.load %arg6[%c0_68, %c0_69] : memref<8x1xf32, #tpu.memory_space<vmem>>, vector<8x1xf32>
      tpu.vector_store %arg6[%c0_68, %c0_69], %262 {strides = array<i32>} : memref<8x1xf32, #tpu.memory_space<vmem>>, vector<8x1xf32>,
    } else {
    }
    return
  }
  func.func @transform_0(%arg0: i32) -> (i32, i32, i32) {
    %c0_i32 = arith.constant 0 : i32
    %c0_i32_0 = arith.constant 0 : i32
    %c0_i32_1 = arith.constant 0 : i32
    return %arg0, %c0_i32, %c0_i32_0 : i32, i32, i32
  }
  func.func @transform_1(%arg0: i32) -> (i32, i32) {
    %c0_i32 = arith.constant 0 : i32
    %c0_i32_0 = arith.constant 0 : i32
    %c0_i32_1 = arith.constant 0 : i32
    return %c0_i32, %c0_i32_0 : i32, i32
  }
  func.func @transform_2(%arg0: i32) -> (i32, i32) {
    %c0_i32 = arith.constant 0 : i32
    %c0_i32_0 = arith.constant 0 : i32
    %c0_i32_1 = arith.constant 0 : i32
    return %c0_i32, %c0_i32_0 : i32, i32
  }
  func.func @transform_3(%arg0: i32) -> (i32, i32) {
    %c0_i32 = arith.constant 0 : i32
    %c0_i32_0 = arith.constant 0 : i32
    %c0_i32_1 = arith.constant 0 : i32
    return %c0_i32, %c0_i32_0 : i32, i32
  }
  func.func @transform_4(%arg0: i32) -> (i32, i32) {
    %c0_i32 = arith.constant 0 : i32
    %c0_i32_0 = arith.constant 0 : i32
    %c0_i32_1 = arith.constant 0 : i32
    return %c0_i32, %c0_i32_0 : i32, i32
  }
  func.func @transform_5(%arg0: i32) -> (i32, i32) {
    %c0_i32 = arith.constant 0 : i32
    %c0_i32_0 = arith.constant 0 : i32
    %c0_i32_1 = arith.constant 0 : i32
    return %c0_i32, %c0_i32_0 : i32, i32
  }
}

</mosaic_0001>

<llo_original>
// kernel: tpu_custom_call.1
$region0: #{tpu_custom_call.1}
  #allocation0 [shape = 'u32[]', space=smem, size = 0x4, offset = 0x4, fixed_abs, tag = 'smem constant byte address 0x4 - core index']
  #allocation1 [shape = 'u32[144,128]{1,0:T(1,128)}', space=vmem, size = 0x12000, scoped, tag = 'internal scratch']
  #allocation2 [shape = 'f32[8,128]{1,0:T(8,128)}', space=vmem, size = 0x1000, scoped, tag = 'scratch operand']
  #allocation3 [shape = 'f32[8,128]{1,0:T(8,128)}', space=vmem, size = 0x1000, scoped, tag = 'scratch operand']
  %s0 = inlined_call_operand.hbm [shape: f32[8,8,512], index: 0, kind: input, shape index: {}]
  %s1 = inlined_call_operand.hbm [shape: f32[128,512], index: 1, kind: input, shape index: {}]
  %s2 = inlined_call_operand.vmem [shape: f32[1,128], index: 2, kind: input, shape index: {}]
  %s3 = inlined_call_operand.hbm [shape: f32[8,128], index: 3, kind: input, shape index: {}]
  %s4 = inlined_call_operand.vmem [shape: f32[1,128], index: 4, kind: input, shape index: {}]
  %s5 = inlined_call_operand.vmem [shape: f32[8,1], index: 5, kind: output, shape index: {}]
  %s6 = sld [smem:[#allocation0]]
  $region50: #{tpu_custom_call.1} parent=0
    _
  %s8 = ssub.s32 1, %s6
  %s9 = scalar_select 0, %s8, %s6
  $region1: #{tpu_custom_call.1} parent=0
    #allocation4 [shape = 'u8[131072]{0}', space=vmem, size = 0x20000, scoped, tag = 'input window, operand 0, single buffered']
    #allocation5 [shape = 's32[1]{0}', space=sflag, size = 0x4, scoped, tag = 'scoped memory for tpu_custom_call.1']
    #allocation6 [shape = 'u8[262144]{0}', space=vmem, size = 0x40000, scoped, tag = 'input window, operand 1, single buffered']
    #allocation7 [shape = 's32[1]{0}', space=sflag, size = 0x4, scoped, tag = 'scoped memory for tpu_custom_call.1']
    #allocation8 [shape = 'u8[4096]{0}', space=vmem, size = 0x1000, scoped, tag = 'input window, operand 3, single buffered']
    %10 = vsyncpa [#allocation5], 0
    %11 = vsyncpa [#allocation7], 0
    // Predicated region
    $region2: #{tpu_custom_call.1} parent=1 // pred_check
      _
    $region3: #{tpu_custom_call.1} parent=1 // pred_check_branch
      %13 = sbr.rel (0) target = $region5
    $region4: #{tpu_custom_call.1} parent=1 // pred_region
      %s15 = ssub.s32 4096, 4096
      %16 = vsyncadd [#allocation5], %s15
      %s17 = sshll.u32 [#allocation4], 4
      %s18 = int_to_ptr.vmem [resolvable:$true] %s17
      %23 = dma.hbm_to_vmem [thread:$0]  %s0, 4096, %s18, [#allocation5], 512, 512, 32
    $region5: #{tpu_custom_call.1} parent=1 // pred_fallthru
      _
    // Predicated region
    $region6: #{tpu_custom_call.1} parent=1 // pred_check
      _
    $region7: #{tpu_custom_call.1} parent=1 // pred_check_branch
      %25 = sbr.rel (0) target = $region9
    $region8: #{tpu_custom_call.1} parent=1 // pred_region
      %s27 = ssub.s32 8192, 8192
      %28 = vsyncadd [#allocation7], %s27
      %s29 = sshll.u32 [#allocation6], 4
      %s30 = int_to_ptr.vmem [resolvable:$true] %s29
      %35 = dma.hbm_to_vmem [thread:$0]  %s1, 8192, %s30, [#allocation7], 512, 512, 32
    $region9: #{tpu_custom_call.1} parent=1 // pred_fallthru
      _
    // Predicated region
    $region10: #{tpu_custom_call.1} parent=1 // pred_check
      _
    $region11: #{tpu_custom_call.1} parent=1 // pred_check_branch
      %37 = sbr.rel (0) target = $region13
    $region12: #{tpu_custom_call.1} parent=1 // pred_region
      _
    $region13: #{tpu_custom_call.1} parent=1 // pred_fallthru
      _
    // Predicated region
    $region14: #{tpu_custom_call.1} parent=1 // pred_check
      _
    $region15: #{tpu_custom_call.1} parent=1 // pred_check_branch
      %39 = sbr.rel (0) target = $region17
    $region16: #{tpu_custom_call.1} parent=1 // pred_region
      %s41 = ssub.s32 128, 128
      %42 = vsyncadd [#allocation7], %s41
      %s44 = sshll.u32 [#allocation8], 4
      %s45 = int_to_ptr.vmem [resolvable:$true] %s44
      %47 = dma.hbm_to_vmem [thread:$0]  %s3, 128, %s45, [#allocation7]
    $region17: #{tpu_custom_call.1} parent=1 // pred_fallthru
      _
    // Predicated region
    $region18: #{tpu_custom_call.1} parent=1 // pred_check
      _
    $region19: #{tpu_custom_call.1} parent=1 // pred_check_branch
      %49 = sbr.rel (0) target = $region21
    $region20: #{tpu_custom_call.1} parent=1 // pred_region
      _
    $region21: #{tpu_custom_call.1} parent=1 // pred_fallthru
      _
    // Predicated region
    $region22: #{tpu_custom_call.1} parent=1 // pred_check
      _
    $region23: #{tpu_custom_call.1} parent=1 // pred_check_branch
      %51 = sbr.rel (0) target = $region25
    $region24: #{tpu_custom_call.1} parent=1 // pred_region
      %52 = dma.done [#allocation5], 4096
    $region25: #{tpu_custom_call.1} parent=1 // pred_fallthru
      _
    // Predicated region
    $region26: #{tpu_custom_call.1} parent=1 // pred_check
      _
    $region27: #{tpu_custom_call.1} parent=1 // pred_check_branch
      %54 = sbr.rel (0) target = $region29
    $region28: #{tpu_custom_call.1} parent=1 // pred_region
      %55 = dma.done [#allocation7], 8192
    $region29: #{tpu_custom_call.1} parent=1 // pred_fallthru
      _
    // Predicated region
    $region30: #{tpu_custom_call.1} parent=1 // pred_check
      _
    $region31: #{tpu_custom_call.1} parent=1 // pred_check_branch
      %57 = sbr.rel (0) target = $region33
    $region32: #{tpu_custom_call.1} parent=1 // pred_region
      %58 = dma.done [#allocation7], 128
    $region33: #{tpu_custom_call.1} parent=1 // pred_fallthru
      _
    %p59 = scmp.eq.s32.totalorder 0, 0
    // Predicated region
    $region34: #{tpu_custom_call.1} parent=1 // pred_check
      %p60 = pneg %p59
    $region35: #{tpu_custom_call.1} parent=1 // pred_check_branch
      %62 = sbr.rel (%p60) target = $region37
    $region36: #{tpu_custom_call.1} parent=1 // pred_region
      %63 = vst [vmem:[#allocation2] sm:$0xff] 0.0
      %64 = vst [vmem:[#allocation3] sm:$0xff] 0.0
    $region37: #{tpu_custom_call.1} parent=1 // pred_fallthru
      _
    %v65 = vld [vmem:[#allocation6] sm:$0xff]
    %v66 = vld [vmem:[#allocation6 + $0x8] sm:$0xff]
    %v67 = vld [vmem:[#allocation6 + $0x10] sm:$0xff]
    %v68 = vld [vmem:[#allocation6 + $0x18] sm:$0xff]
    %v69 = vld [vmem:[#allocation6 + $0x20] sm:$0xff]
    %v70 = vld [vmem:[#allocation6 + $0x28] sm:$0xff]
    %v71 = vld [vmem:[#allocation6 + $0x30] sm:$0xff]
    %v72 = vld [vmem:[#allocation6 + $0x38] sm:$0xff]
    %v73 = vld [vmem:[#allocation6 + $0x40] sm:$0xff]
    %v74 = vld [vmem:[#allocation6 + $0x48] sm:$0xff]
    %v75 = vld [vmem:[#allocation6 + $0x50] sm:$0xff]
    %v76 = vld [vmem:[#allocation6 + $0x58] sm:$0xff]
    %v77 = vld [vmem:[#allocation6 + $0x60] sm:$0xff]
    %v78 = vld [vmem:[#allocation6 + $0x68] sm:$0xff]
    %v79 = vld [vmem:[#allocation6 + $0x70] sm:$0xff]
    %v80 = vld [vmem:[#allocation6 + $0x78] sm:$0xff]
    %v81 = vld [vmem:[#allocation6 + $0x80] sm:$0xff]
    %v82 = vld [vmem:[#allocation6 + $0x88] sm:$0xff]
    %v83 = vld [vmem:[#allocation6 + $0x90] sm:$0xff]
    %v84 = vld [vmem:[#allocation6 + $0x98] sm:$0xff]
    %v85 = vld [vmem:[#allocation6 + $0xa0] sm:$0xff]
    %v86 = vld [vmem:[#allocation6 + $0xa8] sm:$0xff]
    %v87 = vld [vmem:[#allocation6 + $0xb0] sm:$0xff]
    %v88 = vld [vmem:[#allocation6 + $0xb8] sm:$0xff]
    %v89 = vld [vmem:[#allocation6 + $0xc0] sm:$0xff]
    %v90 = vld [vmem:[#allocation6 + $0xc8] sm:$0xff]
    %v91 = vld [vmem:[#allocation6 + $0xd0] sm:$0xff]
    %v92 = vld [vmem:[#allocation6 + $0xd8] sm:$0xff]
    %v93 = vld [vmem:[#allocation6 + $0xe0] sm:$0xff]
    %v94 = vld [vmem:[#allocation6 + $0xe8] sm:$0xff]
    %v95 = vld [vmem:[#allocation6 + $0xf0] sm:$0xff]
    %v96 = vld [vmem:[#allocation6 + $0xf8] sm:$0xff]
    %v97 = vld [vmem:[#allocation6 + $0x100] sm:$0xff]
    %v98 = vld [vmem:[#allocation6 + $0x108] sm:$0xff]
    %v99 = vld [vmem:[#allocation6 + $0x110] sm:$0xff]
    %v100 = vld [vmem:[#allocation6 + $0x118] sm:$0xff]
    %v101 = vld [vmem:[#allocation6 + $0x120] sm:$0xff]
    %v102 = vld [vmem:[#allocation6 + $0x128] sm:$0xff]
    %v103 = vld [vmem:[#allocation6 + $0x130] sm:$0xff]
    %v104 = vld [vmem:[#allocation6 + $0x138] sm:$0xff]
    %v105 = vld [vmem:[#allocation6 + $0x140] sm:$0xff]
    %v106 = vld [vmem:[#allocation6 + $0x148] sm:$0xff]
    %v107 = vld [vmem:[#allocation6 + $0x150] sm:$0xff]
    %v108 = vld [vmem:[#allocation6 + $0x158] sm:$0xff]
    %v109 = vld [vmem:[#allocation6 + $0x160] sm:$0xff]
    %v110 = vld [vmem:[#allocation6 + $0x168] sm:$0xff]
    %v111 = vld [vmem:[#allocation6 + $0x170] sm:$0xff]
    %v112 = vld [vmem:[#allocation6 + $0x178] sm:$0xff]
    %v113 = vld [vmem:[#allocation6 + $0x180] sm:$0xff]
    %v114 = vld [vmem:[#allocation6 + $0x188] sm:$0xff]
    %v115 = vld [vmem:[#allocation6 + $0x190] sm:$0xff]
    %v116 = vld [vmem:[#allocation6 + $0x198] sm:$0xff]
    %v117 = vld [vmem:[#allocation6 + $0x1a0] sm:$0xff]
    %v118 = vld [vmem:[#allocation6 + $0x1a8] sm:$0xff]
    %v119 = vld [vmem:[#allocation6 + $0x1b0] sm:$0xff]
    %v120 = vld [vmem:[#allocation6 + $0x1b8] sm:$0xff]
    %v121 = vld [vmem:[#allocation6 + $0x1c0] sm:$0xff]
    %v122 = vld [vmem:[#allocation6 + $0x1c8] sm:$0xff]
    %v123 = vld [vmem:[#allocation6 + $0x1d0] sm:$0xff]
    %v124 = vld [vmem:[#allocation6 + $0x1d8] sm:$0xff]
    %v125 = vld [vmem:[#allocation6 + $0x1e0] sm:$0xff]
    %v126 = vld [vmem:[#allocation6 + $0x1e8] sm:$0xff]
    %v127 = vld [vmem:[#allocation6 + $0x1f0] sm:$0xff]
    %v128 = vld [vmem:[#allocation6 + $0x1f8] sm:$0xff]
    %v129 = vld [vmem:[#allocation2] sm:$0xff]
    %v130 = vld [vmem:[#allocation3] sm:$0xff]
    %v131 = vld [vmem:[#allocation4] sm:$0xff]
    %v132 = vld [vmem:[#allocation4 + $0x8] sm:$0xff]
    %v133 = vld [vmem:[#allocation4 + $0x10] sm:$0xff]
    %v134 = vld [vmem:[#allocation4 + $0x18] sm:$0xff]
    %135 = vmatprep.subr.mxu0 %v126
    %136 = vmatpush1.msra.mxu0 %v125
    %137 = vmatprep.subr.mxu0 %v122
    %138 = vmatpush1.msra.mxu0 %v121
    %139 = vmatprep.subr.mxu0 %v118
    %140 = vmatpush1.msra.mxu0 %v117
    %141 = vmatprep.subr.mxu0 %v114
    %142 = vmatpush1.msra.mxu0 %v113
    %143 = vmatprep.subr.mxu0 %v110
    %144 = vmatpush1.msra.mxu0 %v109
    %145 = vmatprep.subr.mxu0 %v106
    %146 = vmatpush1.msra.mxu0 %v105
    %147 = vmatprep.subr.mxu0 %v102
    %148 = vmatpush1.msra.mxu0 %v101
    %149 = vmatprep.subr.mxu0 %v98
    %150 = vmatpush1.msra.mxu0 %v97
    %151 = vmatprep.subr.mxu0 %v94
    %152 = vmatpush1.msra.mxu0 %v93
    %153 = vmatprep.subr.mxu0 %v90
    %154 = vmatpush1.msra.mxu0 %v89
    %155 = vmatprep.subr.mxu0 %v86
    %156 = vmatpush1.msra.mxu0 %v85
    %157 = vmatprep.subr.mxu0 %v82
    %158 = vmatpush1.msra.mxu0 %v81
    %159 = vmatprep.subr.mxu0 %v78
    %160 = vmatpush1.msra.mxu0 %v77
    %161 = vmatprep.subr.mxu0 %v74
    %162 = vmatpush1.msra.mxu0 %v73
    %163 = vmatprep.subr.mxu0 %v70
    %164 = vmatpush1.msra.mxu0 %v69
    %165 = vmatprep.subr.mxu0 %v66
    %166 = vmatpush1.msra.mxu0 %v65
    %167 = vmatprep.subr.mxu0 0.0
    %168 = vmatpush2.msra.mxu0 0.0
    %169 = vmatprep.subr.mxu0 0.0
    %170 = vmatpush2.msra.mxu0 0.0
    %171 = vmatprep.subr.mxu0 0.0
    %172 = vmatpush2.msra.mxu0 0.0
    %173 = vmatprep.subr.mxu0 0.0
    %174 = vmatpush2.msra.mxu0 0.0
    %175 = vmatprep.subr.mxu0 0.0
    %176 = vmatpush2.msra.mxu0 0.0
    %177 = vmatprep.subr.mxu0 0.0
    %178 = vmatpush2.msra.mxu0 0.0
    %179 = vmatprep.subr.mxu0 0.0
    %180 = vmatpush2.msra.mxu0 0.0
    %181 = vmatprep.subr.mxu0 0.0
    %182 = vmatpush2.msra.mxu0 0.0
    %183 = vmatprep.subr.mxu0 0.0
    %184 = vmatpush2.msra.mxu0 0.0
    %185 = vmatprep.subr.mxu0 0.0
    %186 = vmatpush2.msra.mxu0 0.0
    %187 = vmatprep.subr.mxu0 0.0
    %188 = vmatpush2.msra.mxu0 0.0
    %189 = vmatprep.subr.mxu0 0.0
    %190 = vmatpush2.msra.mxu0 0.0
    %191 = vmatprep.subr.mxu0 0.0
    %192 = vmatpush2.msra.mxu0 0.0
    %193 = vmatprep.subr.mxu0 0.0
    %194 = vmatpush2.msra.mxu0 0.0
    %195 = vmatprep.subr.mxu0 0.0
    %196 = vmatpush2.msra.mxu0 0.0
    %197 = vmatprep.subr.mxu0 0.0
    %198 = vmatpush2.msra.mxu0 0.0
    %199 = vmatprep.mubr.f32.mxu0 0.0
    %200 = vmatmul.mubr.f32.gmra.mxu0 %v129
    %v201 = vpop.f32.mrf.mxu0
    %v202 = vadd.f32 0.0, %v201
    %v203 = vpop.f32.mrf.mxu0
    %v204 = vadd.f32 0.0, %v203
    %205 = vdwg.mxu0
    %206 = vmatprep.subr.mxu0 %v128
    %207 = vmatpush1.msra.mxu0 %v127
    %208 = vmatprep.subr.mxu0 %v124
    %209 = vmatpush1.msra.mxu0 %v123
    %210 = vmatprep.subr.mxu0 %v120
    %211 = vmatpush1.msra.mxu0 %v119
    %212 = vmatprep.subr.mxu0 %v116
    %213 = vmatpush1.msra.mxu0 %v115
    %214 = vmatprep.subr.mxu0 %v112
    %215 = vmatpush1.msra.mxu0 %v111
    %216 = vmatprep.subr.mxu0 %v108
    %217 = vmatpush1.msra.mxu0 %v107
    %218 = vmatprep.subr.mxu0 %v104
    %219 = vmatpush1.msra.mxu0 %v103
    %220 = vmatprep.subr.mxu0 %v100
    %221 = vmatpush1.msra.mxu0 %v99
    %222 = vmatprep.subr.mxu0 %v96
    %223 = vmatpush1.msra.mxu0 %v95
    %224 = vmatprep.subr.mxu0 %v92
    %225 = vmatpush1.msra.mxu0 %v91
    %226 = vmatprep.subr.mxu0 %v88
    %227 = vmatpush1.msra.mxu0 %v87
    %228 = vmatprep.subr.mxu0 %v84
    %229 = vmatpush1.msra.mxu0 %v83
    %230 = vmatprep.subr.mxu0 %v80
    %231 = vmatpush1.msra.mxu0 %v79
    %232 = vmatprep.subr.mxu0 %v76
    %233 = vmatpush1.msra.mxu0 %v75
    %234 = vmatprep.subr.mxu0 %v72
    %235 = vmatpush1.msra.mxu0 %v71
    %236 = vmatprep.subr.mxu0 %v68
    %237 = vmatpush1.msra.mxu0 %v67
    %238 = vmatprep.subr.mxu0 0.0
    %239 = vmatpush2.msra.mxu0 0.0
    %240 = vmatprep.subr.mxu0 0.0
    %241 = vmatpush2.msra.mxu0 0.0
    %242 = vmatprep.subr.mxu0 0.0
    %243 = vmatpush2.msra.mxu0 0.0
    %244 = vmatprep.subr.mxu0 0.0
    %245 = vmatpush2.msra.mxu0 0.0
    %246 = vmatprep.subr.mxu0 0.0
    %247 = vmatpush2.msra.mxu0 0.0
    %248 = vmatprep.subr.mxu0 0.0
    %249 = vmatpush2.msra.mxu0 0.0
    %250 = vmatprep.subr.mxu0 0.0
    %251 = vmatpush2.msra.mxu0 0.0
    %252 = vmatprep.subr.mxu0 0.0
    %253 = vmatpush2.msra.mxu0 0.0
    %254 = vmatprep.subr.mxu0 0.0
    %255 = vmatpush2.msra.mxu0 0.0
    %256 = vmatprep.subr.mxu0 0.0
    %257 = vmatpush2.msra.mxu0 0.0
    %258 = vmatprep.subr.mxu0 0.0
    %259 = vmatpush2.msra.mxu0 0.0
    %260 = vmatprep.subr.mxu0 0.0
    %261 = vmatpush2.msra.mxu0 0.0
    %262 = vmatprep.subr.mxu0 0.0
    %263 = vmatpush2.msra.mxu0 0.0
    %264 = vmatprep.subr.mxu0 0.0
    %265 = vmatpush2.msra.mxu0 0.0
    %266 = vmatprep.subr.mxu0 0.0
    %267 = vmatpush2.msra.mxu0 0.0
    %268 = vmatprep.subr.mxu0 0.0
    %269 = vmatpush2.msra.mxu0 0.0
    %270 = vmatprep.mubr.f32.mxu0 0.0
    %271 = vmatmul.mubr.f32.gmra.mxu0 %v129
    %v272 = vpop.f32.mrf.mxu0
    %v273 = vadd.f32 0.0, %v272
    %v274 = vpop.f32.mrf.mxu0
    %v275 = vadd.f32 0.0, %v274
    %276 = vdwg.mxu0
    %v277 = vadd.f32 %v131, %v202
    %v278 = vadd.f32 %v132, %v204
    %v279 = vadd.f32 %v133, %v273
    %v280 = vadd.f32 %v134, %v275
    %v281 = vxor.u32 %v277, 2147483648
    %v282 = vmul.f32 %v281, 1.442695
    %v283 = vpow.pop %v282
    %v284 = vadd.f32 %v283, 1.0
    %v285 = vrcp.pop %v284
    %v286 = vmul.f32 1.0, %v285
    %v287 = vxor.u32 %v278, 2147483648
    %v288 = vmul.f32 %v287, 1.442695
    %v289 = vpow.pop %v288
    %v290 = vadd.f32 %v289, 1.0
    %v291 = vrcp.pop %v290
    %v292 = vmul.f32 1.0, %v291
    %v293 = vtanh.pop %v279
    %v294 = vxor.u32 %v280, 2147483648
    %v295 = vmul.f32 %v294, 1.442695
    %v296 = vpow.pop %v295
    %v297 = vadd.f32 %v296, 1.0
    %v298 = vrcp.pop %v297
    %v299 = vmul.f32 1.0, %v298
    %v300 = vmul.f32 %v292, %v130
    %v301 = vmul.f32 %v286, %v293
    %v302 = vadd.f32 %v300, %v301
    %v303 = vtanh.pop %v302
    %v304 = vmul.f32 %v299, %v303
    %s305 = scalar_lea.vmem [#allocation4], 32
    %v306 = vld [vmem:[%s305] sm:$0xff]
    %v307 = vld [vmem:[%s305 + $0x8] sm:$0xff]
    %v308 = vld [vmem:[%s305 + $0x10] sm:$0xff]
    %v309 = vld [vmem:[%s305 + $0x18] sm:$0xff]
    %310 = vmatprep.subr.mxu0 %v126
    %311 = vmatpush1.msra.mxu0 %v125
    %312 = vmatprep.subr.mxu0 %v122
    %313 = vmatpush1.msra.mxu0 %v121
    %314 = vmatprep.subr.mxu0 %v118
    %315 = vmatpush1.msra.mxu0 %v117
    %316 = vmatprep.subr.mxu0 %v114
    %317 = vmatpush1.msra.mxu0 %v113
    %318 = vmatprep.subr.mxu0 %v110
    %319 = vmatpush1.msra.mxu0 %v109
    %320 = vmatprep.subr.mxu0 %v106
    %321 = vmatpush1.msra.mxu0 %v105
    %322 = vmatprep.subr.mxu0 %v102
    %323 = vmatpush1.msra.mxu0 %v101
    %324 = vmatprep.subr.mxu0 %v98
    %325 = vmatpush1.msra.mxu0 %v97
    %326 = vmatprep.subr.mxu0 %v94
    %327 = vmatpush1.msra.mxu0 %v93
    %328 = vmatprep.subr.mxu0 %v90
    %329 = vmatpush1.msra.mxu0 %v89
    %330 = vmatprep.subr.mxu0 %v86
    %331 = vmatpush1.msra.mxu0 %v85
    %332 = vmatprep.subr.mxu0 %v82
    %333 = vmatpush1.msra.mxu0 %v81
    %334 = vmatprep.subr.mxu0 %v78
    %335 = vmatpush1.msra.mxu0 %v77
    %336 = vmatprep.subr.mxu0 %v74
    %337 = vmatpush1.msra.mxu0 %v73
    %338 = vmatprep.subr.mxu0 %v70
    %339 = vmatpush1.msra.mxu0 %v69
    %340 = vmatprep.subr.mxu0 %v66
    %341 = vmatpush1.msra.mxu0 %v65
    %342 = vmatprep.subr.mxu0 0.0
    %343 = vmatpush2.msra.mxu0 0.0
    %344 = vmatprep.subr.mxu0 0.0
    %345 = vmatpush2.msra.mxu0 0.0
    %346 = vmatprep.subr.mxu0 0.0
    %347 = vmatpush2.msra.mxu0 0.0
    %348 = vmatprep.subr.mxu0 0.0
    %349 = vmatpush2.msra.mxu0 0.0
    %350 = vmatprep.subr.mxu0 0.0
    %351 = vmatpush2.msra.mxu0 0.0
    %352 = vmatprep.subr.mxu0 0.0
    %353 = vmatpush2.msra.mxu0 0.0
    %354 = vmatprep.subr.mxu0 0.0
    %355 = vmatpush2.msra.mxu0 0.0
    %356 = vmatprep.subr.mxu0 0.0
    %357 = vmatpush2.msra.mxu0 0.0
    %358 = vmatprep.subr.mxu0 0.0
    %359 = vmatpush2.msra.mxu0 0.0
    %360 = vmatprep.subr.mxu0 0.0
    %361 = vmatpush2.msra.mxu0 0.0
    %362 = vmatprep.subr.mxu0 0.0
    %363 = vmatpush2.msra.mxu0 0.0
    %364 = vmatprep.subr.mxu0 0.0
    %365 = vmatpush2.msra.mxu0 0.0
    %366 = vmatprep.subr.mxu0 0.0
    %367 = vmatpush2.msra.mxu0 0.0
    %368 = vmatprep.subr.mxu0 0.0
    %369 = vmatpush2.msra.mxu0 0.0
    %370 = vmatprep.subr.mxu0 0.0
    %371 = vmatpush2.msra.mxu0 0.0
    %372 = vmatprep.subr.mxu0 0.0
    %373 = vmatpush2.msra.mxu0 0.0
    %374 = vmatprep.mubr.f32.mxu0 0.0
    %375 = vmatmul.mubr.f32.gmra.mxu0 %v304
    %v376 = vpop.f32.mrf.mxu0
    %v377 = vadd.f32 0.0, %v376
    %v378 = vpop.f32.mrf.mxu0
    %v379 = vadd.f32 0.0, %v378
    %380 = vdwg.mxu0
    %381 = vmatprep.subr.mxu0 %v128
    %382 = vmatpush1.msra.mxu0 %v127
    %383 = vmatprep.subr.mxu0 %v124
    %384 = vmatpush1.msra.mxu0 %v123
    %385 = vmatprep.subr.mxu0 %v120
    %386 = vmatpush1.msra.mxu0 %v119
    %387 = vmatprep.subr.mxu0 %v116
    %388 = vmatpush1.msra.mxu0 %v115
    %389 = vmatprep.subr.mxu0 %v112
    %390 = vmatpush1.msra.mxu0 %v111
    %391 = vmatprep.subr.mxu0 %v108
    %392 = vmatpush1.msra.mxu0 %v107
    %393 = vmatprep.subr.mxu0 %v104
    %394 = vmatpush1.msra.mxu0 %v103
    %395 = vmatprep.subr.mxu0 %v100
    %396 = vmatpush1.msra.mxu0 %v99
    %397 = vmatprep.subr.mxu0 %v96
    %398 = vmatpush1.msra.mxu0 %v95
    %399 = vmatprep.subr.mxu0 %v92
    %400 = vmatpush1.msra.mxu0 %v91
    %401 = vmatprep.subr.mxu0 %v88
    %402 = vmatpush1.msra.mxu0 %v87
    %403 = vmatprep.subr.mxu0 %v84
    %404 = vmatpush1.msra.mxu0 %v83
    %405 = vmatprep.subr.mxu0 %v80
    %406 = vmatpush1.msra.mxu0 %v79
    %407 = vmatprep.subr.mxu0 %v76
    %408 = vmatpush1.msra.mxu0 %v75
    %409 = vmatprep.subr.mxu0 %v72
    %410 = vmatpush1.msra.mxu0 %v71
    %411 = vmatprep.subr.mxu0 %v68
    %412 = vmatpush1.msra.mxu0 %v67
    %413 = vmatprep.subr.mxu0 0.0
    %414 = vmatpush2.msra.mxu0 0.0
    %415 = vmatprep.subr.mxu0 0.0
    %416 = vmatpush2.msra.mxu0 0.0
    %417 = vmatprep.subr.mxu0 0.0
    %418 = vmatpush2.msra.mxu0 0.0
    %419 = vmatprep.subr.mxu0 0.0
    %420 = vmatpush2.msra.mxu0 0.0
    %421 = vmatprep.subr.mxu0 0.0
    %422 = vmatpush2.msra.mxu0 0.0
    %423 = vmatprep.subr.mxu0 0.0
    %424 = vmatpush2.msra.mxu0 0.0
    %425 = vmatprep.subr.mxu0 0.0
    %426 = vmatpush2.msra.mxu0 0.0
    %427 = vmatprep.subr.mxu0 0.0
    %428 = vmatpush2.msra.mxu0 0.0
    %429 = vmatprep.subr.mxu0 0.0
    %430 = vmatpush2.msra.mxu0 0.0
    %431 = vmatprep.subr.mxu0 0.0
    %432 = vmatpush2.msra.mxu0 0.0
    %433 = vmatprep.subr.mxu0 0.0
    %434 = vmatpush2.msra.mxu0 0.0
    %435 = vmatprep.subr.mxu0 0.0
    %436 = vmatpush2.msra.mxu0 0.0
    %437 = vmatprep.subr.mxu0 0.0
    %438 = vmatpush2.msra.mxu0 0.0
    %439 = vmatprep.subr.mxu0 0.0
    %440 = vmatpush2.msra.mxu0 0.0
    %441 = vmatprep.subr.mxu0 0.0
    %442 = vmatpush2.msra.mxu0 0.0
    %443 = vmatprep.subr.mxu0 0.0
    %444 = vmatpush2.msra.mxu0 0.0
    %445 = vmatprep.mubr.f32.mxu0 0.0
    %446 = vmatmul.mubr.f32.gmra.mxu0 %v304
    %v447 = vpop.f32.mrf.mxu0
    %v448 = vadd.f32 0.0, %v447
    %v449 = vpop.f32.mrf.mxu0
    %v450 = vadd.f32 0.0, %v449
    %451 = vdwg.mxu0
    %v452 = vadd.f32 %v306, %v377
    %v453 = vadd.f32 %v307, %v379
    %v454 = vadd.f32 %v308, %v448
    %v455 = vadd.f32 %v309, %v450
    %v456 = vxor.u32 %v452, 2147483648
    %v457 = vmul.f32 %v456, 1.442695
    %v458 = vpow.pop %v457
    %v459 = vadd.f32 %v458, 1.0
    %v460 = vrcp.pop %v459
    %v461 = vmul.f32 1.0, %v460
    %v462 = vxor.u32 %v453, 2147483648
    %v463 = vmul.f32 %v462, 1.442695
    %v464 = vpow.pop %v463
    %v465 = vadd.f32 %v464, 1.0
    %v466 = vrcp.pop %v465
    %v467 = vmul.f32 1.0, %v466
    %v468 = vtanh.pop %v454
    %v469 = vxor.u32 %v455, 2147483648
    %v470 = vmul.f32 %v469, 1.442695
    %v471 = vpow.pop %v470
    %v472 = vadd.f32 %v471, 1.0
    %v473 = vrcp.pop %v472
    %v474 = vmul.f32 1.0, %v473
    %v475 = vmul.f32 %v467, %v302
    %v476 = vmul.f32 %v461, %v468
    %v477 = vadd.f32 %v475, %v476
    %v478 = vtanh.pop %v477
    %v479 = vmul.f32 %v474, %v478
    %s480 = scalar_lea.vmem [#allocation4], 64
    %v481 = vld [vmem:[%s480] sm:$0xff]
    %v482 = vld [vmem:[%s480 + $0x8] sm:$0xff]
    %v483 = vld [vmem:[%s480 + $0x10] sm:$0xff]
    %v484 = vld [vmem:[%s480 + $0x18] sm:$0xff]
    %485 = vmatprep.subr.mxu0 %v126
    %486 = vmatpush1.msra.mxu0 %v125
    %487 = vmatprep.subr.mxu0 %v122
    %488 = vmatpush1.msra.mxu0 %v121
    %489 = vmatprep.subr.mxu0 %v118
    %490 = vmatpush1.msra.mxu0 %v117
    %491 = vmatprep.subr.mxu0 %v114
    %492 = vmatpush1.msra.mxu0 %v113
    %493 = vmatprep.subr.mxu0 %v110
    %494 = vmatpush1.msra.mxu0 %v109
    %495 = vmatprep.subr.mxu0 %v106
    %496 = vmatpush1.msra.mxu0 %v105
    %497 = vmatprep.subr.mxu0 %v102
    %498 = vmatpush1.msra.mxu0 %v101
    %499 = vmatprep.subr.mxu0 %v98
    %500 = vmatpush1.msra.mxu0 %v97
    %501 = vmatprep.subr.mxu0 %v94
    %502 = vmatpush1.msra.mxu0 %v93
    %503 = vmatprep.subr.mxu0 %v90
    %504 = vmatpush1.msra.mxu0 %v89
    %505 = vmatprep.subr.mxu0 %v86
    %506 = vmatpush1.msra.mxu0 %v85
    %507 = vmatprep.subr.mxu0 %v82
    %508 = vmatpush1.msra.mxu0 %v81
    %509 = vmatprep.subr.mxu0 %v78
    %510 = vmatpush1.msra.mxu0 %v77
    %511 = vmatprep.subr.mxu0 %v74
    %512 = vmatpush1.msra.mxu0 %v73
    %513 = vmatprep.subr.mxu0 %v70
    %514 = vmatpush1.msra.mxu0 %v69
    %515 = vmatprep.subr.mxu0 %v66
    %516 = vmatpush1.msra.mxu0 %v65
    %517 = vmatprep.subr.mxu0 0.0
    %518 = vmatpush2.msra.mxu0 0.0
    %519 = vmatprep.subr.mxu0 0.0
    %520 = vmatpush2.msra.mxu0 0.0
    %521 = vmatprep.subr.mxu0 0.0
    %522 = vmatpush2.msra.mxu0 0.0
    %523 = vmatprep.subr.mxu0 0.0
    %524 = vmatpush2.msra.mxu0 0.0
    %525 = vmatprep.subr.mxu0 0.0
    %526 = vmatpush2.msra.mxu0 0.0
    %527 = vmatprep.subr.mxu0 0.0
    %528 = vmatpush2.msra.mxu0 0.0
    %529 = vmatprep.subr.mxu0 0.0
    %530 = vmatpush2.msra.mxu0 0.0
    %531 = vmatprep.subr.mxu0 0.0
    %532 = vmatpush2.msra.mxu0 0.0
    %533 = vmatprep.subr.mxu0 0.0
    %534 = vmatpush2.msra.mxu0 0.0
    %535 = vmatprep.subr.mxu0 0.0
    %536 = vmatpush2.msra.mxu0 0.0
    %537 = vmatprep.subr.mxu0 0.0
    %538 = vmatpush2.msra.mxu0 0.0
    %539 = vmatprep.subr.mxu0 0.0
    %540 = vmatpush2.msra.mxu0 0.0
    %541 = vmatprep.subr.mxu0 0.0
    %542 = vmatpush2.msra.mxu0 0.0
    %543 = vmatprep.subr.mxu0 0.0
    %544 = vmatpush2.msra.mxu0 0.0
    %545 = vmatprep.subr.mxu0 0.0
    %546 = vmatpush2.msra.mxu0 0.0
    %547 = vmatprep.subr.mxu0 0.0
    %548 = vmatpush2.msra.mxu0 0.0
    %549 = vmatprep.mubr.f32.mxu0 0.0
    %550 = vmatmul.mubr.f32.gmra.mxu0 %v479
    %v551 = vpop.f32.mrf.mxu0
    %v552 = vadd.f32 0.0, %v551
    %v553 = vpop.f32.mrf.mxu0
    %v554 = vadd.f32 0.0, %v553
    %555 = vdwg.mxu0
    %556 = vmatprep.subr.mxu0 %v128
    %557 = vmatpush1.msra.mxu0 %v127
    %558 = vmatprep.subr.mxu0 %v124
    %559 = vmatpush1.msra.mxu0 %v123
    %560 = vmatprep.subr.mxu0 %v120
    %561 = vmatpush1.msra.mxu0 %v119
    %562 = vmatprep.subr.mxu0 %v116
    %563 = vmatpush1.msra.mxu0 %v115
    %564 = vmatprep.subr.mxu0 %v112
    %565 = vmatpush1.msra.mxu0 %v111
    %566 = vmatprep.subr.mxu0 %v108
    %567 = vmatpush1.msra.mxu0 %v107
    %568 = vmatprep.subr.mxu0 %v104
    %569 = vmatpush1.msra.mxu0 %v103
    %570 = vmatprep.subr.mxu0 %v100
    %571 = vmatpush1.msra.mxu0 %v99
    %572 = vmatprep.subr.mxu0 %v96
    %573 = vmatpush1.msra.mxu0 %v95
    %574 = vmatprep.subr.mxu0 %v92
    %575 = vmatpush1.msra.mxu0 %v91
    %576 = vmatprep.subr.mxu0 %v88
    %577 = vmatpush1.msra.mxu0 %v87
    %578 = vmatprep.subr.mxu0 %v84
    %579 = vmatpush1.msra.mxu0 %v83
    %580 = vmatprep.subr.mxu0 %v80
    %581 = vmatpush1.msra.mxu0 %v79
    %582 = vmatprep.subr.mxu0 %v76
    %583 = vmatpush1.msra.mxu0 %v75
    %584 = vmatprep.subr.mxu0 %v72
    %585 = vmatpush1.msra.mxu0 %v71
    %586 = vmatprep.subr.mxu0 %v68
    %587 = vmatpush1.msra.mxu0 %v67
    %588 = vmatprep.subr.mxu0 0.0
    %589 = vmatpush2.msra.mxu0 0.0
    %590 = vmatprep.subr.mxu0 0.0
    %591 = vmatpush2.msra.mxu0 0.0
    %592 = vmatprep.subr.mxu0 0.0
    %593 = vmatpush2.msra.mxu0 0.0
    %594 = vmatprep.subr.mxu0 0.0
    %595 = vmatpush2.msra.mxu0 0.0
    %596 = vmatprep.subr.mxu0 0.0
    %597 = vmatpush2.msra.mxu0 0.0
    %598 = vmatprep.subr.mxu0 0.0
    %599 = vmatpush2.msra.mxu0 0.0
    %600 = vmatprep.subr.mxu0 0.0
    %601 = vmatpush2.msra.mxu0 0.0
    %602 = vmatprep.subr.mxu0 0.0
    %603 = vmatpush2.msra.mxu0 0.0
    %604 = vmatprep.subr.mxu0 0.0
    %605 = vmatpush2.msra.mxu0 0.0
    %606 = vmatprep.subr.mxu0 0.0
    %607 = vmatpush2.msra.mxu0 0.0
    %608 = vmatprep.subr.mxu0 0.0
    %609 = vmatpush2.msra.mxu0 0.0
    %610 = vmatprep.subr.mxu0 0.0
    %611 = vmatpush2.msra.mxu0 0.0
    %612 = vmatprep.subr.mxu0 0.0
    %613 = vmatpush2.msra.mxu0 0.0
    %614 = vmatprep.subr.mxu0 0.0
    %615 = vmatpush2.msra.mxu0 0.0
    %616 = vmatprep.subr.mxu0 0.0
    %617 = vmatpush2.msra.mxu0 0.0
    %618 = vmatprep.subr.mxu0 0.0
    %619 = vmatpush2.msra.mxu0 0.0
    %620 = vmatprep.mubr.f32.mxu0 0.0
    %621 = vmatmul.mubr.f32.gmra.mxu0 %v479
    %v622 = vpop.f32.mrf.mxu0
    %v623 = vadd.f32 0.0, %v622
    %v624 = vpop.f32.mrf.mxu0
    %v625 = vadd.f32 0.0, %v624
    %626 = vdwg.mxu0
    %v627 = vadd.f32 %v481, %v552
    %v628 = vadd.f32 %v482, %v554
    %v629 = vadd.f32 %v483, %v623
    %v630 = vadd.f32 %v484, %v625
    %v631 = vxor.u32 %v627, 2147483648
    %v632 = vmul.f32 %v631, 1.442695
    %v633 = vpow.pop %v632
    %v634 = vadd.f32 %v633, 1.0
    %v635 = vrcp.pop %v634
    %v636 = vmul.f32 1.0, %v635
    %v637 = vxor.u32 %v628, 2147483648
    %v638 = vmul.f32 %v637, 1.442695
    %v639 = vpow.pop %v638
    %v640 = vadd.f32 %v639, 1.0
    %v641 = vrcp.pop %v640
    %v642 = vmul.f32 1.0, %v641
    %v643 = vtanh.pop %v629
    %v644 = vxor.u32 %v630, 2147483648
    %v645 = vmul.f32 %v644, 1.442695
    %v646 = vpow.pop %v645
    %v647 = vadd.f32 %v646, 1.0
    %v648 = vrcp.pop %v647
    %v649 = vmul.f32 1.0, %v648
    %v650 = vmul.f32 %v642, %v477
    %v651 = vmul.f32 %v636, %v643
    %v652 = vadd.f32 %v650, %v651
    %v653 = vtanh.pop %v652
    %v654 = vmul.f32 %v649, %v653
    %s655 = scalar_lea.vmem [#allocation4], 96
    %v656 = vld [vmem:[%s655] sm:$0xff]
    %v657 = vld [vmem:[%s655 + $0x8] sm:$0xff]
    %v658 = vld [vmem:[%s655 + $0x10] sm:$0xff]
    %v659 = vld [vmem:[%s655 + $0x18] sm:$0xff]
    %660 = vmatprep.subr.mxu0 %v126
    %661 = vmatpush1.msra.mxu0 %v125
    %662 = vmatprep.subr.mxu0 %v122
    %663 = vmatpush1.msra.mxu0 %v121
    %664 = vmatprep.subr.mxu0 %v118
    %665 = vmatpush1.msra.mxu0 %v117
    %666 = vmatprep.subr.mxu0 %v114
    %667 = vmatpush1.msra.mxu0 %v113
    %668 = vmatprep.subr.mxu0 %v110
    %669 = vmatpush1.msra.mxu0 %v109
    %670 = vmatprep.subr.mxu0 %v106
    %671 = vmatpush1.msra.mxu0 %v105
    %672 = vmatprep.subr.mxu0 %v102
    %673 = vmatpush1.msra.mxu0 %v101
    %674 = vmatprep.subr.mxu0 %v98
    %675 = vmatpush1.msra.mxu0 %v97
    %676 = vmatprep.subr.mxu0 %v94
    %677 = vmatpush1.msra.mxu0 %v93
    %678 = vmatprep.subr.mxu0 %v90
    %679 = vmatpush1.msra.mxu0 %v89
    %680 = vmatprep.subr.mxu0 %v86
    %681 = vmatpush1.msra.mxu0 %v85
    %682 = vmatprep.subr.mxu0 %v82
    %683 = vmatpush1.msra.mxu0 %v81
    %684 = vmatprep.subr.mxu0 %v78
    %685 = vmatpush1.msra.mxu0 %v77
    %686 = vmatprep.subr.mxu0 %v74
    %687 = vmatpush1.msra.mxu0 %v73
    %688 = vmatprep.subr.mxu0 %v70
    %689 = vmatpush1.msra.mxu0 %v69
    %690 = vmatprep.subr.mxu0 %v66
    %691 = vmatpush1.msra.mxu0 %v65
    %692 = vmatprep.subr.mxu0 0.0
    %693 = vmatpush2.msra.mxu0 0.0
    %694 = vmatprep.subr.mxu0 0.0
    %695 = vmatpush2.msra.mxu0 0.0
    %696 = vmatprep.subr.mxu0 0.0
    %697 = vmatpush2.msra.mxu0 0.0
    %698 = vmatprep.subr.mxu0 0.0
    %699 = vmatpush2.msra.mxu0 0.0
    %700 = vmatprep.subr.mxu0 0.0
    %701 = vmatpush2.msra.mxu0 0.0
    %702 = vmatprep.subr.mxu0 0.0
    %703 = vmatpush2.msra.mxu0 0.0
    %704 = vmatprep.subr.mxu0 0.0
    %705 = vmatpush2.msra.mxu0 0.0
    %706 = vmatprep.subr.mxu0 0.0
    %707 = vmatpush2.msra.mxu0 0.0
    %708 = vmatprep.subr.mxu0 0.0
    %709 = vmatpush2.msra.mxu0 0.0
    %710 = vmatprep.subr.mxu0 0.0
    %711 = vmatpush2.msra.mxu0 0.0
    %712 = vmatprep.subr.mxu0 0.0
    %713 = vmatpush2.msra.mxu0 0.0
    %714 = vmatprep.subr.mxu0 0.0
    %715 = vmatpush2.msra.mxu0 0.0
    %716 = vmatprep.subr.mxu0 0.0
    %717 = vmatpush2.msra.mxu0 0.0
    %718 = vmatprep.subr.mxu0 0.0
    %719 = vmatpush2.msra.mxu0 0.0
    %720 = vmatprep.subr.mxu0 0.0
    %721 = vmatpush2.msra.mxu0 0.0
    %722 = vmatprep.subr.mxu0 0.0
    %723 = vmatpush2.msra.mxu0 0.0
    %724 = vmatprep.mubr.f32.mxu0 0.0
    %725 = vmatmul.mubr.f32.gmra.mxu0 %v654
    %v726 = vpop.f32.mrf.mxu0
    %v727 = vadd.f32 0.0, %v726
    %v728 = vpop.f32.mrf.mxu0
    %v729 = vadd.f32 0.0, %v728
    %730 = vdwg.mxu0
    %731 = vmatprep.subr.mxu0 %v128
    %732 = vmatpush1.msra.mxu0 %v127
    %733 = vmatprep.subr.mxu0 %v124
    %734 = vmatpush1.msra.mxu0 %v123
    %735 = vmatprep.subr.mxu0 %v120
    %736 = vmatpush1.msra.mxu0 %v119
    %737 = vmatprep.subr.mxu0 %v116
    %738 = vmatpush1.msra.mxu0 %v115
    %739 = vmatprep.subr.mxu0 %v112
    %740 = vmatpush1.msra.mxu0 %v111
    %741 = vmatprep.subr.mxu0 %v108
    %742 = vmatpush1.msra.mxu0 %v107
    %743 = vmatprep.subr.mxu0 %v104
    %744 = vmatpush1.msra.mxu0 %v103
    %745 = vmatprep.subr.mxu0 %v100
    %746 = vmatpush1.msra.mxu0 %v99
    %747 = vmatprep.subr.mxu0 %v96
    %748 = vmatpush1.msra.mxu0 %v95
    %749 = vmatprep.subr.mxu0 %v92
    %750 = vmatpush1.msra.mxu0 %v91
    %751 = vmatprep.subr.mxu0 %v88
    %752 = vmatpush1.msra.mxu0 %v87
    %753 = vmatprep.subr.mxu0 %v84
    %754 = vmatpush1.msra.mxu0 %v83
    %755 = vmatprep.subr.mxu0 %v80
    %756 = vmatpush1.msra.mxu0 %v79
    %757 = vmatprep.subr.mxu0 %v76
    %758 = vmatpush1.msra.mxu0 %v75
    %759 = vmatprep.subr.mxu0 %v72
    %760 = vmatpush1.msra.mxu0 %v71
    %761 = vmatprep.subr.mxu0 %v68
    %762 = vmatpush1.msra.mxu0 %v67
    %763 = vmatprep.subr.mxu0 0.0
    %764 = vmatpush2.msra.mxu0 0.0
    %765 = vmatprep.subr.mxu0 0.0
    %766 = vmatpush2.msra.mxu0 0.0
    %767 = vmatprep.subr.mxu0 0.0
    %768 = vmatpush2.msra.mxu0 0.0
    %769 = vmatprep.subr.mxu0 0.0
    %770 = vmatpush2.msra.mxu0 0.0
    %771 = vmatprep.subr.mxu0 0.0
    %772 = vmatpush2.msra.mxu0 0.0
    %773 = vmatprep.subr.mxu0 0.0
    %774 = vmatpush2.msra.mxu0 0.0
    %775 = vmatprep.subr.mxu0 0.0
    %776 = vmatpush2.msra.mxu0 0.0
    %777 = vmatprep.subr.mxu0 0.0
    %778 = vmatpush2.msra.mxu0 0.0
    %779 = vmatprep.subr.mxu0 0.0
    %780 = vmatpush2.msra.mxu0 0.0
    %781 = vmatprep.subr.mxu0 0.0
    %782 = vmatpush2.msra.mxu0 0.0
    %783 = vmatprep.subr.mxu0 0.0
    %784 = vmatpush2.msra.mxu0 0.0
    %785 = vmatprep.subr.mxu0 0.0
    %786 = vmatpush2.msra.mxu0 0.0
    %787 = vmatprep.subr.mxu0 0.0
    %788 = vmatpush2.msra.mxu0 0.0
    %789 = vmatprep.subr.mxu0 0.0
    %790 = vmatpush2.msra.mxu0 0.0
    %791 = vmatprep.subr.mxu0 0.0
    %792 = vmatpush2.msra.mxu0 0.0
    %793 = vmatprep.subr.mxu0 0.0
    %794 = vmatpush2.msra.mxu0 0.0
    %795 = vmatprep.mubr.f32.mxu0 0.0
    %796 = vmatmul.mubr.f32.gmra.mxu0 %v654
    %v797 = vpop.f32.mrf.mxu0
    %v798 = vadd.f32 0.0, %v797
    %v799 = vpop.f32.mrf.mxu0
    %v800 = vadd.f32 0.0, %v799
    %801 = vdwg.mxu0
    %v802 = vadd.f32 %v656, %v727
    %v803 = vadd.f32 %v657, %v729
    %v804 = vadd.f32 %v658, %v798
    %v805 = vadd.f32 %v659, %v800
    %v806 = vxor.u32 %v802, 2147483648
    %v807 = vmul.f32 %v806, 1.442695
    %v808 = vpow.pop %v807
    %v809 = vadd.f32 %v808, 1.0
    %v810 = vrcp.pop %v809
    %v811 = vmul.f32 1.0, %v810
    %v812 = vxor.u32 %v803, 2147483648
    %v813 = vmul.f32 %v812, 1.442695
    %v814 = vpow.pop %v813
    %v815 = vadd.f32 %v814, 1.0
    %v816 = vrcp.pop %v815
    %v817 = vmul.f32 1.0, %v816
    %v818 = vtanh.pop %v804
    %v819 = vxor.u32 %v805, 2147483648
    %v820 = vmul.f32 %v819, 1.442695
    %v821 = vpow.pop %v820
    %v822 = vadd.f32 %v821, 1.0
    %v823 = vrcp.pop %v822
    %v824 = vmul.f32 1.0, %v823
    %v825 = vmul.f32 %v817, %v652
    %v826 = vmul.f32 %v811, %v818
    %v827 = vadd.f32 %v825, %v826
    %v828 = vtanh.pop %v827
    %v829 = vmul.f32 %v824, %v828
    %s830 = scalar_lea.vmem [#allocation4], 128
    %v831 = vld [vmem:[%s830] sm:$0xff]
    %v832 = vld [vmem:[%s830 + $0x8] sm:$0xff]
    %v833 = vld [vmem:[%s830 + $0x10] sm:$0xff]
    %v834 = vld [vmem:[%s830 + $0x18] sm:$0xff]
    %835 = vmatprep.subr.mxu0 %v126
    %836 = vmatpush1.msra.mxu0 %v125
    %837 = vmatprep.subr.mxu0 %v122
    %838 = vmatpush1.msra.mxu0 %v121
    %839 = vmatprep.subr.mxu0 %v118
    %840 = vmatpush1.msra.mxu0 %v117
    %841 = vmatprep.subr.mxu0 %v114
    %842 = vmatpush1.msra.mxu0 %v113
    %843 = vmatprep.subr.mxu0 %v110
    %844 = vmatpush1.msra.mxu0 %v109
    %845 = vmatprep.subr.mxu0 %v106
    %846 = vmatpush1.msra.mxu0 %v105
    %847 = vmatprep.subr.mxu0 %v102
    %848 = vmatpush1.msra.mxu0 %v101
    %849 = vmatprep.subr.mxu0 %v98
    %850 = vmatpush1.msra.mxu0 %v97
    %851 = vmatprep.subr.mxu0 %v94
    %852 = vmatpush1.msra.mxu0 %v93
    %853 = vmatprep.subr.mxu0 %v90
    %854 = vmatpush1.msra.mxu0 %v89
    %855 = vmatprep.subr.mxu0 %v86
    %856 = vmatpush1.msra.mxu0 %v85
    %857 = vmatprep.subr.mxu0 %v82
    %858 = vmatpush1.msra.mxu0 %v81
    %859 = vmatprep.subr.mxu0 %v78
    %860 = vmatpush1.msra.mxu0 %v77
    %861 = vmatprep.subr.mxu0 %v74
    %862 = vmatpush1.msra.mxu0 %v73
    %863 = vmatprep.subr.mxu0 %v70
    %864 = vmatpush1.msra.mxu0 %v69
    %865 = vmatprep.subr.mxu0 %v66
    %866 = vmatpush1.msra.mxu0 %v65
    %867 = vmatprep.subr.mxu0 0.0
    %868 = vmatpush2.msra.mxu0 0.0
    %869 = vmatprep.subr.mxu0 0.0
    %870 = vmatpush2.msra.mxu0 0.0
    %871 = vmatprep.subr.mxu0 0.0
    %872 = vmatpush2.msra.mxu0 0.0
    %873 = vmatprep.subr.mxu0 0.0
    %874 = vmatpush2.msra.mxu0 0.0
    %875 = vmatprep.subr.mxu0 0.0
    %876 = vmatpush2.msra.mxu0 0.0
    %877 = vmatprep.subr.mxu0 0.0
    %878 = vmatpush2.msra.mxu0 0.0
    %879 = vmatprep.subr.mxu0 0.0
    %880 = vmatpush2.msra.mxu0 0.0
    %881 = vmatprep.subr.mxu0 0.0
    %882 = vmatpush2.msra.mxu0 0.0
    %883 = vmatprep.subr.mxu0 0.0
    %884 = vmatpush2.msra.mxu0 0.0
    %885 = vmatprep.subr.mxu0 0.0
    %886 = vmatpush2.msra.mxu0 0.0
    %887 = vmatprep.subr.mxu0 0.0
    %888 = vmatpush2.msra.mxu0 0.0
    %889 = vmatprep.subr.mxu0 0.0
    %890 = vmatpush2.msra.mxu0 0.0
    %891 = vmatprep.subr.mxu0 0.0
    %892 = vmatpush2.msra.mxu0 0.0
    %893 = vmatprep.subr.mxu0 0.0
    %894 = vmatpush2.msra.mxu0 0.0
    %895 = vmatprep.subr.mxu0 0.0
    %896 = vmatpush2.msra.mxu0 0.0
    %897 = vmatprep.subr.mxu0 0.0
    %898 = vmatpush2.msra.mxu0 0.0
    %899 = vmatprep.mubr.f32.mxu0 0.0
    %900 = vmatmul.mubr.f32.gmra.mxu0 %v829
    %v901 = vpop.f32.mrf.mxu0
    %v902 = vadd.f32 0.0, %v901
    %v903 = vpop.f32.mrf.mxu0
    %v904 = vadd.f32 0.0, %v903
    %905 = vdwg.mxu0
    %906 = vmatprep.subr.mxu0 %v128
    %907 = vmatpush1.msra.mxu0 %v127
    %908 = vmatprep.subr.mxu0 %v124
    %909 = vmatpush1.msra.mxu0 %v123
    %910 = vmatprep.subr.mxu0 %v120
    %911 = vmatpush1.msra.mxu0 %v119
    %912 = vmatprep.subr.mxu0 %v116
    %913 = vmatpush1.msra.mxu0 %v115
    %914 = vmatprep.subr.mxu0 %v112
    %915 = vmatpush1.msra.mxu0 %v111
    %916 = vmatprep.subr.mxu0 %v108
    %917 = vmatpush1.msra.mxu0 %v107
    %918 = vmatprep.subr.mxu0 %v104
    %919 = vmatpush1.msra.mxu0 %v103
    %920 = vmatprep.subr.mxu0 %v100
    %921 = vmatpush1.msra.mxu0 %v99
    %922 = vmatprep.subr.mxu0 %v96
    %923 = vmatpush1.msra.mxu0 %v95
    %924 = vmatprep.subr.mxu0 %v92
    %925 = vmatpush1.msra.mxu0 %v91
    %926 = vmatprep.subr.mxu0 %v88
    %927 = vmatpush1.msra.mxu0 %v87
    %928 = vmatprep.subr.mxu0 %v84
    %929 = vmatpush1.msra.mxu0 %v83
    %930 = vmatprep.subr.mxu0 %v80
    %931 = vmatpush1.msra.mxu0 %v79
    %932 = vmatprep.subr.mxu0 %v76
    %933 = vmatpush1.msra.mxu0 %v75
    %934 = vmatprep.subr.mxu0 %v72
    %935 = vmatpush1.msra.mxu0 %v71
    %936 = vmatprep.subr.mxu0 %v68
    %937 = vmatpush1.msra.mxu0 %v67
    %938 = vmatprep.subr.mxu0 0.0
    %939 = vmatpush2.msra.mxu0 0.0
    %940 = vmatprep.subr.mxu0 0.0
    %941 = vmatpush2.msra.mxu0 0.0
    %942 = vmatprep.subr.mxu0 0.0
    %943 = vmatpush2.msra.mxu0 0.0
    %944 = vmatprep.subr.mxu0 0.0
    %945 = vmatpush2.msra.mxu0 0.0
    %946 = vmatprep.subr.mxu0 0.0
    %947 = vmatpush2.msra.mxu0 0.0
    %948 = vmatprep.subr.mxu0 0.0
    %949 = vmatpush2.msra.mxu0 0.0
    %950 = vmatprep.subr.mxu0 0.0
    %951 = vmatpush2.msra.mxu0 0.0
    %952 = vmatprep.subr.mxu0 0.0
    %953 = vmatpush2.msra.mxu0 0.0
    %954 = vmatprep.subr.mxu0 0.0
    %955 = vmatpush2.msra.mxu0 0.0
    %956 = vmatprep.subr.mxu0 0.0
    %957 = vmatpush2.msra.mxu0 0.0
    %958 = vmatprep.subr.mxu0 0.0
    %959 = vmatpush2.msra.mxu0 0.0
    %960 = vmatprep.subr.mxu0 0.0
    %961 = vmatpush2.msra.mxu0 0.0
    %962 = vmatprep.subr.mxu0 0.0
    %963 = vmatpush2.msra.mxu0 0.0
    %964 = vmatprep.subr.mxu0 0.0
    %965 = vmatpush2.msra.mxu0 0.0
    %966 = vmatprep.subr.mxu0 0.0
    %967 = vmatpush2.msra.mxu0 0.0
    %968 = vmatprep.subr.mxu0 0.0
    %969 = vmatpush2.msra.mxu0 0.0
    %970 = vmatprep.mubr.f32.mxu0 0.0
    %971 = vmatmul.mubr.f32.gmra.mxu0 %v829
    %v972 = vpop.f32.mrf.mxu0
    %v973 = vadd.f32 0.0, %v972
    %v974 = vpop.f32.mrf.mxu0
    %v975 = vadd.f32 0.0, %v974
    %976 = vdwg.mxu0
    %v977 = vadd.f32 %v831, %v902
    %v978 = vadd.f32 %v832, %v904
    %v979 = vadd.f32 %v833, %v973
    %v980 = vadd.f32 %v834, %v975
    %v981 = vxor.u32 %v977, 2147483648
    %v982 = vmul.f32 %v981, 1.442695
    %v983 = vpow.pop %v982
    %v984 = vadd.f32 %v983, 1.0
    %v985 = vrcp.pop %v984
    %v986 = vmul.f32 1.0, %v985
    %v987 = vxor.u32 %v978, 2147483648
    %v988 = vmul.f32 %v987, 1.442695
    %v989 = vpow.pop %v988
    %v990 = vadd.f32 %v989, 1.0
    %v991 = vrcp.pop %v990
    %v992 = vmul.f32 1.0, %v991
    %v993 = vtanh.pop %v979
    %v994 = vxor.u32 %v980, 2147483648
    %v995 = vmul.f32 %v994, 1.442695
    %v996 = vpow.pop %v995
    %v997 = vadd.f32 %v996, 1.0
    %v998 = vrcp.pop %v997
    %v999 = vmul.f32 1.0, %v998
    %v1000 = vmul.f32 %v992, %v827
    %v1001 = vmul.f32 %v986, %v993
    %v1002 = vadd.f32 %v1000, %v1001
    %v1003 = vtanh.pop %v1002
    %v1004 = vmul.f32 %v999, %v1003
    %s1005 = scalar_lea.vmem [#allocation4], 160
    %v1006 = vld [vmem:[%s1005] sm:$0xff]
    %v1007 = vld [vmem:[%s1005 + $0x8] sm:$0xff]
    %v1008 = vld [vmem:[%s1005 + $0x10] sm:$0xff]
    %v1009 = vld [vmem:[%s1005 + $0x18] sm:$0xff]
    %1010 = vmatprep.subr.mxu0 %v126
    %1011 = vmatpush1.msra.mxu0 %v125
    %1012 = vmatprep.subr.mxu0 %v122
    %1013 = vmatpush1.msra.mxu0 %v121
    %1014 = vmatprep.subr.mxu0 %v118
    %1015 = vmatpush1.msra.mxu0 %v117
    %1016 = vmatprep.subr.mxu0 %v114
    %1017 = vmatpush1.msra.mxu0 %v113
    %1018 = vmatprep.subr.mxu0 %v110
    %1019 = vmatpush1.msra.mxu0 %v109
    %1020 = vmatprep.subr.mxu0 %v106
    %1021 = vmatpush1.msra.mxu0 %v105
    %1022 = vmatprep.subr.mxu0 %v102
    %1023 = vmatpush1.msra.mxu0 %v101
    %1024 = vmatprep.subr.mxu0 %v98
    %1025 = vmatpush1.msra.mxu0 %v97
    %1026 = vmatprep.subr.mxu0 %v94
    %1027 = vmatpush1.msra.mxu0 %v93
    %1028 = vmatprep.subr.mxu0 %v90
    %1029 = vmatpush1.msra.mxu0 %v89
    %1030 = vmatprep.subr.mxu0 %v86
    %1031 = vmatpush1.msra.mxu0 %v85
    %1032 = vmatprep.subr.mxu0 %v82
    %1033 = vmatpush1.msra.mxu0 %v81
    %1034 = vmatprep.subr.mxu0 %v78
    %1035 = vmatpush1.msra.mxu0 %v77
    %1036 = vmatprep.subr.mxu0 %v74
    %1037 = vmatpush1.msra.mxu0 %v73
    %1038 = vmatprep.subr.mxu0 %v70
    %1039 = vmatpush1.msra.mxu0 %v69
    %1040 = vmatprep.subr.mxu0 %v66
    %1041 = vmatpush1.msra.mxu0 %v65
    %1042 = vmatprep.subr.mxu0 0.0
    %1043 = vmatpush2.msra.mxu0 0.0
    %1044 = vmatprep.subr.mxu0 0.0
    %1045 = vmatpush2.msra.mxu0 0.0
    %1046 = vmatprep.subr.mxu0 0.0
    %1047 = vmatpush2.msra.mxu0 0.0
    %1048 = vmatprep.subr.mxu0 0.0
    %1049 = vmatpush2.msra.mxu0 0.0
    %1050 = vmatprep.subr.mxu0 0.0
    %1051 = vmatpush2.msra.mxu0 0.0
    %1052 = vmatprep.subr.mxu0 0.0
    %1053 = vmatpush2.msra.mxu0 0.0
    %1054 = vmatprep.subr.mxu0 0.0
    %1055 = vmatpush2.msra.mxu0 0.0
    %1056 = vmatprep.subr.mxu0 0.0
    %1057 = vmatpush2.msra.mxu0 0.0
    %1058 = vmatprep.subr.mxu0 0.0
    %1059 = vmatpush2.msra.mxu0 0.0
    %1060 = vmatprep.subr.mxu0 0.0
    %1061 = vmatpush2.msra.mxu0 0.0
    %1062 = vmatprep.subr.mxu0 0.0
    %1063 = vmatpush2.msra.mxu0 0.0
    %1064 = vmatprep.subr.mxu0 0.0
    %1065 = vmatpush2.msra.mxu0 0.0
    %1066 = vmatprep.subr.mxu0 0.0
    %1067 = vmatpush2.msra.mxu0 0.0
    %1068 = vmatprep.subr.mxu0 0.0
    %1069 = vmatpush2.msra.mxu0 0.0
    %1070 = vmatprep.subr.mxu0 0.0
    %1071 = vmatpush2.msra.mxu0 0.0
    %1072 = vmatprep.subr.mxu0 0.0
    %1073 = vmatpush2.msra.mxu0 0.0
    %1074 = vmatprep.mubr.f32.mxu0 0.0
    %1075 = vmatmul.mubr.f32.gmra.mxu0 %v1004
    %v1076 = vpop.f32.mrf.mxu0
    %v1077 = vadd.f32 0.0, %v1076
    %v1078 = vpop.f32.mrf.mxu0
    %v1079 = vadd.f32 0.0, %v1078
    %1080 = vdwg.mxu0
    %1081 = vmatprep.subr.mxu0 %v128
    %1082 = vmatpush1.msra.mxu0 %v127
    %1083 = vmatprep.subr.mxu0 %v124
    %1084 = vmatpush1.msra.mxu0 %v123
    %1085 = vmatprep.subr.mxu0 %v120
    %1086 = vmatpush1.msra.mxu0 %v119
    %1087 = vmatprep.subr.mxu0 %v116
    %1088 = vmatpush1.msra.mxu0 %v115
    %1089 = vmatprep.subr.mxu0 %v112
    %1090 = vmatpush1.msra.mxu0 %v111
    %1091 = vmatprep.subr.mxu0 %v108
    %1092 = vmatpush1.msra.mxu0 %v107
    %1093 = vmatprep.subr.mxu0 %v104
    %1094 = vmatpush1.msra.mxu0 %v103
    %1095 = vmatprep.subr.mxu0 %v100
    %1096 = vmatpush1.msra.mxu0 %v99
    %1097 = vmatprep.subr.mxu0 %v96
    %1098 = vmatpush1.msra.mxu0 %v95
    %1099 = vmatprep.subr.mxu0 %v92
    %1100 = vmatpush1.msra.mxu0 %v91
    %1101 = vmatprep.subr.mxu0 %v88
    %1102 = vmatpush1.msra.mxu0 %v87
    %1103 = vmatprep.subr.mxu0 %v84
    %1104 = vmatpush1.msra.mxu0 %v83
    %1105 = vmatprep.subr.mxu0 %v80
    %1106 = vmatpush1.msra.mxu0 %v79
    %1107 = vmatprep.subr.mxu0 %v76
    %1108 = vmatpush1.msra.mxu0 %v75
    %1109 = vmatprep.subr.mxu0 %v72
    %1110 = vmatpush1.msra.mxu0 %v71
    %1111 = vmatprep.subr.mxu0 %v68
    %1112 = vmatpush1.msra.mxu0 %v67
    %1113 = vmatprep.subr.mxu0 0.0
    %1114 = vmatpush2.msra.mxu0 0.0
    %1115 = vmatprep.subr.mxu0 0.0
    %1116 = vmatpush2.msra.mxu0 0.0
    %1117 = vmatprep.subr.mxu0 0.0
    %1118 = vmatpush2.msra.mxu0 0.0
    %1119 = vmatprep.subr.mxu0 0.0
    %1120 = vmatpush2.msra.mxu0 0.0
    %1121 = vmatprep.subr.mxu0 0.0
    %1122 = vmatpush2.msra.mxu0 0.0
    %1123 = vmatprep.subr.mxu0 0.0
    %1124 = vmatpush2.msra.mxu0 0.0
    %1125 = vmatprep.subr.mxu0 0.0
    %1126 = vmatpush2.msra.mxu0 0.0
    %1127 = vmatprep.subr.mxu0 0.0
    %1128 = vmatpush2.msra.mxu0 0.0
    %1129 = vmatprep.subr.mxu0 0.0
    %1130 = vmatpush2.msra.mxu0 0.0
    %1131 = vmatprep.subr.mxu0 0.0
    %1132 = vmatpush2.msra.mxu0 0.0
    %1133 = vmatprep.subr.mxu0 0.0
    %1134 = vmatpush2.msra.mxu0 0.0
    %1135 = vmatprep.subr.mxu0 0.0
    %1136 = vmatpush2.msra.mxu0 0.0
    %1137 = vmatprep.subr.mxu0 0.0
    %1138 = vmatpush2.msra.mxu0 0.0
    %1139 = vmatprep.subr.mxu0 0.0
    %1140 = vmatpush2.msra.mxu0 0.0
    %1141 = vmatprep.subr.mxu0 0.0
    %1142 = vmatpush2.msra.mxu0 0.0
    %1143 = vmatprep.subr.mxu0 0.0
    %1144 = vmatpush2.msra.mxu0 0.0
    %1145 = vmatprep.mubr.f32.mxu0 0.0
    %1146 = vmatmul.mubr.f32.gmra.mxu0 %v1004
    %v1147 = vpop.f32.mrf.mxu0
    %v1148 = vadd.f32 0.0, %v1147
    %v1149 = vpop.f32.mrf.mxu0
    %v1150 = vadd.f32 0.0, %v1149
    %1151 = vdwg.mxu0
    %v1152 = vadd.f32 %v1006, %v1077
    %v1153 = vadd.f32 %v1007, %v1079
    %v1154 = vadd.f32 %v1008, %v1148
    %v1155 = vadd.f32 %v1009, %v1150
    %v1156 = vxor.u32 %v1152, 2147483648
    %v1157 = vmul.f32 %v1156, 1.442695
    %v1158 = vpow.pop %v1157
    %v1159 = vadd.f32 %v1158, 1.0
    %v1160 = vrcp.pop %v1159
    %v1161 = vmul.f32 1.0, %v1160
    %v1162 = vxor.u32 %v1153, 2147483648
    %v1163 = vmul.f32 %v1162, 1.442695
    %v1164 = vpow.pop %v1163
    %v1165 = vadd.f32 %v1164, 1.0
    %v1166 = vrcp.pop %v1165
    %v1167 = vmul.f32 1.0, %v1166
    %v1168 = vtanh.pop %v1154
    %v1169 = vxor.u32 %v1155, 2147483648
    %v1170 = vmul.f32 %v1169, 1.442695
    %v1171 = vpow.pop %v1170
    %v1172 = vadd.f32 %v1171, 1.0
    %v1173 = vrcp.pop %v1172
    %v1174 = vmul.f32 1.0, %v1173
    %v1175 = vmul.f32 %v1167, %v1002
    %v1176 = vmul.f32 %v1161, %v1168
    %v1177 = vadd.f32 %v1175, %v1176
    %v1178 = vtanh.pop %v1177
    %v1179 = vmul.f32 %v1174, %v1178
    %s1180 = scalar_lea.vmem [#allocation4], 192
    %v1181 = vld [vmem:[%s1180] sm:$0xff]
    %v1182 = vld [vmem:[%s1180 + $0x8] sm:$0xff]
    %v1183 = vld [vmem:[%s1180 + $0x10] sm:$0xff]
    %v1184 = vld [vmem:[%s1180 + $0x18] sm:$0xff]
    %1185 = vmatprep.subr.mxu0 %v126
    %1186 = vmatpush1.msra.mxu0 %v125
    %1187 = vmatprep.subr.mxu0 %v122
    %1188 = vmatpush1.msra.mxu0 %v121
    %1189 = vmatprep.subr.mxu0 %v118
    %1190 = vmatpush1.msra.mxu0 %v117
    %1191 = vmatprep.subr.mxu0 %v114
    %1192 = vmatpush1.msra.mxu0 %v113
    %1193 = vmatprep.subr.mxu0 %v110
    %1194 = vmatpush1.msra.mxu0 %v109
    %1195 = vmatprep.subr.mxu0 %v106
    %1196 = vmatpush1.msra.mxu0 %v105
    %1197 = vmatprep.subr.mxu0 %v102
    %1198 = vmatpush1.msra.mxu0 %v101
    %1199 = vmatprep.subr.mxu0 %v98
    %1200 = vmatpush1.msra.mxu0 %v97
    %1201 = vmatprep.subr.mxu0 %v94
    %1202 = vmatpush1.msra.mxu0 %v93
    %1203 = vmatprep.subr.mxu0 %v90
    %1204 = vmatpush1.msra.mxu0 %v89
    %1205 = vmatprep.subr.mxu0 %v86
    %1206 = vmatpush1.msra.mxu0 %v85
    %1207 = vmatprep.subr.mxu0 %v82
    %1208 = vmatpush1.msra.mxu0 %v81
    %1209 = vmatprep.subr.mxu0 %v78
    %1210 = vmatpush1.msra.mxu0 %v77
    %1211 = vmatprep.subr.mxu0 %v74
    %1212 = vmatpush1.msra.mxu0 %v73
    %1213 = vmatprep.subr.mxu0 %v70
    %1214 = vmatpush1.msra.mxu0 %v69
    %1215 = vmatprep.subr.mxu0 %v66
    %1216 = vmatpush1.msra.mxu0 %v65
    %1217 = vmatprep.subr.mxu0 0.0
    %1218 = vmatpush2.msra.mxu0 0.0
    %1219 = vmatprep.subr.mxu0 0.0
    %1220 = vmatpush2.msra.mxu0 0.0
    %1221 = vmatprep.subr.mxu0 0.0
    %1222 = vmatpush2.msra.mxu0 0.0
    %1223 = vmatprep.subr.mxu0 0.0
    %1224 = vmatpush2.msra.mxu0 0.0
    %1225 = vmatprep.subr.mxu0 0.0
    %1226 = vmatpush2.msra.mxu0 0.0
    %1227 = vmatprep.subr.mxu0 0.0
    %1228 = vmatpush2.msra.mxu0 0.0
    %1229 = vmatprep.subr.mxu0 0.0
    %1230 = vmatpush2.msra.mxu0 0.0
    %1231 = vmatprep.subr.mxu0 0.0
    %1232 = vmatpush2.msra.mxu0 0.0
    %1233 = vmatprep.subr.mxu0 0.0
    %1234 = vmatpush2.msra.mxu0 0.0
    %1235 = vmatprep.subr.mxu0 0.0
    %1236 = vmatpush2.msra.mxu0 0.0
    %1237 = vmatprep.subr.mxu0 0.0
    %1238 = vmatpush2.msra.mxu0 0.0
    %1239 = vmatprep.subr.mxu0 0.0
    %1240 = vmatpush2.msra.mxu0 0.0
    %1241 = vmatprep.subr.mxu0 0.0
    %1242 = vmatpush2.msra.mxu0 0.0
    %1243 = vmatprep.subr.mxu0 0.0
    %1244 = vmatpush2.msra.mxu0 0.0
    %1245 = vmatprep.subr.mxu0 0.0
    %1246 = vmatpush2.msra.mxu0 0.0
    %1247 = vmatprep.subr.mxu0 0.0
    %1248 = vmatpush2.msra.mxu0 0.0
    %1249 = vmatprep.mubr.f32.mxu0 0.0
    %1250 = vmatmul.mubr.f32.gmra.mxu0 %v1179
    %v1251 = vpop.f32.mrf.mxu0
    %v1252 = vadd.f32 0.0, %v1251
    %v1253 = vpop.f32.mrf.mxu0
    %v1254 = vadd.f32 0.0, %v1253
    %1255 = vdwg.mxu0
    %1256 = vmatprep.subr.mxu0 %v128
    %1257 = vmatpush1.msra.mxu0 %v127
    %1258 = vmatprep.subr.mxu0 %v124
    %1259 = vmatpush1.msra.mxu0 %v123
    %1260 = vmatprep.subr.mxu0 %v120
    %1261 = vmatpush1.msra.mxu0 %v119
    %1262 = vmatprep.subr.mxu0 %v116
    %1263 = vmatpush1.msra.mxu0 %v115
    %1264 = vmatprep.subr.mxu0 %v112
    %1265 = vmatpush1.msra.mxu0 %v111
    %1266 = vmatprep.subr.mxu0 %v108
    %1267 = vmatpush1.msra.mxu0 %v107
    %1268 = vmatprep.subr.mxu0 %v104
    %1269 = vmatpush1.msra.mxu0 %v103
    %1270 = vmatprep.subr.mxu0 %v100
    %1271 = vmatpush1.msra.mxu0 %v99
    %1272 = vmatprep.subr.mxu0 %v96
    %1273 = vmatpush1.msra.mxu0 %v95
    %1274 = vmatprep.subr.mxu0 %v92
    %1275 = vmatpush1.msra.mxu0 %v91
    %1276 = vmatprep.subr.mxu0 %v88
    %1277 = vmatpush1.msra.mxu0 %v87
    %1278 = vmatprep.subr.mxu0 %v84
    %1279 = vmatpush1.msra.mxu0 %v83
    %1280 = vmatprep.subr.mxu0 %v80
    %1281 = vmatpush1.msra.mxu0 %v79
    %1282 = vmatprep.subr.mxu0 %v76
    %1283 = vmatpush1.msra.mxu0 %v75
    %1284 = vmatprep.subr.mxu0 %v72
    %1285 = vmatpush1.msra.mxu0 %v71
    %1286 = vmatprep.subr.mxu0 %v68
    %1287 = vmatpush1.msra.mxu0 %v67
    %1288 = vmatprep.subr.mxu0 0.0
    %1289 = vmatpush2.msra.mxu0 0.0
    %1290 = vmatprep.subr.mxu0 0.0
    %1291 = vmatpush2.msra.mxu0 0.0
    %1292 = vmatprep.subr.mxu0 0.0
    %1293 = vmatpush2.msra.mxu0 0.0
    %1294 = vmatprep.subr.mxu0 0.0
    %1295 = vmatpush2.msra.mxu0 0.0
    %1296 = vmatprep.subr.mxu0 0.0
    %1297 = vmatpush2.msra.mxu0 0.0
    %1298 = vmatprep.subr.mxu0 0.0
    %1299 = vmatpush2.msra.mxu0 0.0
    %1300 = vmatprep.subr.mxu0 0.0
    %1301 = vmatpush2.msra.mxu0 0.0
    %1302 = vmatprep.subr.mxu0 0.0
    %1303 = vmatpush2.msra.mxu0 0.0
    %1304 = vmatprep.subr.mxu0 0.0
    %1305 = vmatpush2.msra.mxu0 0.0
    %1306 = vmatprep.subr.mxu0 0.0
    %1307 = vmatpush2.msra.mxu0 0.0
    %1308 = vmatprep.subr.mxu0 0.0
    %1309 = vmatpush2.msra.mxu0 0.0
    %1310 = vmatprep.subr.mxu0 0.0
    %1311 = vmatpush2.msra.mxu0 0.0
    %1312 = vmatprep.subr.mxu0 0.0
    %1313 = vmatpush2.msra.mxu0 0.0
    %1314 = vmatprep.subr.mxu0 0.0
    %1315 = vmatpush2.msra.mxu0 0.0
    %1316 = vmatprep.subr.mxu0 0.0
    %1317 = vmatpush2.msra.mxu0 0.0
    %1318 = vmatprep.subr.mxu0 0.0
    %1319 = vmatpush2.msra.mxu0 0.0
    %1320 = vmatprep.mubr.f32.mxu0 0.0
    %1321 = vmatmul.mubr.f32.gmra.mxu0 %v1179
    %v1322 = vpop.f32.mrf.mxu0
    %v1323 = vadd.f32 0.0, %v1322
    %v1324 = vpop.f32.mrf.mxu0
    %v1325 = vadd.f32 0.0, %v1324
    %1326 = vdwg.mxu0
    %v1327 = vadd.f32 %v1181, %v1252
    %v1328 = vadd.f32 %v1182, %v1254
    %v1329 = vadd.f32 %v1183, %v1323
    %v1330 = vadd.f32 %v1184, %v1325
    %v1331 = vxor.u32 %v1327, 2147483648
    %v1332 = vmul.f32 %v1331, 1.442695
    %v1333 = vpow.pop %v1332
    %v1334 = vadd.f32 %v1333, 1.0
    %v1335 = vrcp.pop %v1334
    %v1336 = vmul.f32 1.0, %v1335
    %v1337 = vxor.u32 %v1328, 2147483648
    %v1338 = vmul.f32 %v1337, 1.442695
    %v1339 = vpow.pop %v1338
    %v1340 = vadd.f32 %v1339, 1.0
    %v1341 = vrcp.pop %v1340
    %v1342 = vmul.f32 1.0, %v1341
    %v1343 = vtanh.pop %v1329
    %v1344 = vxor.u32 %v1330, 2147483648
    %v1345 = vmul.f32 %v1344, 1.442695
    %v1346 = vpow.pop %v1345
    %v1347 = vadd.f32 %v1346, 1.0
    %v1348 = vrcp.pop %v1347
    %v1349 = vmul.f32 1.0, %v1348
    %v1350 = vmul.f32 %v1342, %v1177
    %v1351 = vmul.f32 %v1336, %v1343
    %v1352 = vadd.f32 %v1350, %v1351
    %v1353 = vtanh.pop %v1352
    %v1354 = vmul.f32 %v1349, %v1353
    %s1355 = scalar_lea.vmem [#allocation4], 224
    %v1356 = vld [vmem:[%s1355] sm:$0xff]
    %v1357 = vld [vmem:[%s1355 + $0x8] sm:$0xff]
    %v1358 = vld [vmem:[%s1355 + $0x10] sm:$0xff]
    %v1359 = vld [vmem:[%s1355 + $0x18] sm:$0xff]
    %1360 = vmatprep.subr.mxu0 %v126
    %1361 = vmatpush1.msra.mxu0 %v125
    %1362 = vmatprep.subr.mxu0 %v122
    %1363 = vmatpush1.msra.mxu0 %v121
    %1364 = vmatprep.subr.mxu0 %v118
    %1365 = vmatpush1.msra.mxu0 %v117
    %1366 = vmatprep.subr.mxu0 %v114
    %1367 = vmatpush1.msra.mxu0 %v113
    %1368 = vmatprep.subr.mxu0 %v110
    %1369 = vmatpush1.msra.mxu0 %v109
    %1370 = vmatprep.subr.mxu0 %v106
    %1371 = vmatpush1.msra.mxu0 %v105
    %1372 = vmatprep.subr.mxu0 %v102
    %1373 = vmatpush1.msra.mxu0 %v101
    %1374 = vmatprep.subr.mxu0 %v98
    %1375 = vmatpush1.msra.mxu0 %v97
    %1376 = vmatprep.subr.mxu0 %v94
    %1377 = vmatpush1.msra.mxu0 %v93
    %1378 = vmatprep.subr.mxu0 %v90
    %1379 = vmatpush1.msra.mxu0 %v89
    %1380 = vmatprep.subr.mxu0 %v86
    %1381 = vmatpush1.msra.mxu0 %v85
    %1382 = vmatprep.subr.mxu0 %v82
    %1383 = vmatpush1.msra.mxu0 %v81
    %1384 = vmatprep.subr.mxu0 %v78
    %1385 = vmatpush1.msra.mxu0 %v77
    %1386 = vmatprep.subr.mxu0 %v74
    %1387 = vmatpush1.msra.mxu0 %v73
    %1388 = vmatprep.subr.mxu0 %v70
    %1389 = vmatpush1.msra.mxu0 %v69
    %1390 = vmatprep.subr.mxu0 %v66
    %1391 = vmatpush1.msra.mxu0 %v65
    %1392 = vmatprep.subr.mxu0 0.0
    %1393 = vmatpush2.msra.mxu0 0.0
    %1394 = vmatprep.subr.mxu0 0.0
    %1395 = vmatpush2.msra.mxu0 0.0
    %1396 = vmatprep.subr.mxu0 0.0
    %1397 = vmatpush2.msra.mxu0 0.0
    %1398 = vmatprep.subr.mxu0 0.0
    %1399 = vmatpush2.msra.mxu0 0.0
    %1400 = vmatprep.subr.mxu0 0.0
    %1401 = vmatpush2.msra.mxu0 0.0
    %1402 = vmatprep.subr.mxu0 0.0
    %1403 = vmatpush2.msra.mxu0 0.0
    %1404 = vmatprep.subr.mxu0 0.0
    %1405 = vmatpush2.msra.mxu0 0.0
    %1406 = vmatprep.subr.mxu0 0.0
    %1407 = vmatpush2.msra.mxu0 0.0
    %1408 = vmatprep.subr.mxu0 0.0
    %1409 = vmatpush2.msra.mxu0 0.0
    %1410 = vmatprep.subr.mxu0 0.0
    %1411 = vmatpush2.msra.mxu0 0.0
    %1412 = vmatprep.subr.mxu0 0.0
    %1413 = vmatpush2.msra.mxu0 0.0
    %1414 = vmatprep.subr.mxu0 0.0
    %1415 = vmatpush2.msra.mxu0 0.0
    %1416 = vmatprep.subr.mxu0 0.0
    %1417 = vmatpush2.msra.mxu0 0.0
    %1418 = vmatprep.subr.mxu0 0.0
    %1419 = vmatpush2.msra.mxu0 0.0
    %1420 = vmatprep.subr.mxu0 0.0
    %1421 = vmatpush2.msra.mxu0 0.0
    %1422 = vmatprep.subr.mxu0 0.0
    %1423 = vmatpush2.msra.mxu0 0.0
    %1424 = vmatprep.mubr.f32.mxu0 0.0
    %1425 = vmatmul.mubr.f32.gmra.mxu0 %v1354
    %v1426 = vpop.f32.mrf.mxu0
    %v1427 = vadd.f32 0.0, %v1426
    %v1428 = vpop.f32.mrf.mxu0
    %v1429 = vadd.f32 0.0, %v1428
    %1430 = vdwg.mxu0
    %1431 = vmatprep.subr.mxu0 %v128
    %1432 = vmatpush1.msra.mxu0 %v127
    %1433 = vmatprep.subr.mxu0 %v124
    %1434 = vmatpush1.msra.mxu0 %v123
    %1435 = vmatprep.subr.mxu0 %v120
    %1436 = vmatpush1.msra.mxu0 %v119
    %1437 = vmatprep.subr.mxu0 %v116
    %1438 = vmatpush1.msra.mxu0 %v115
    %1439 = vmatprep.subr.mxu0 %v112
    %1440 = vmatpush1.msra.mxu0 %v111
    %1441 = vmatprep.subr.mxu0 %v108
    %1442 = vmatpush1.msra.mxu0 %v107
    %1443 = vmatprep.subr.mxu0 %v104
    %1444 = vmatpush1.msra.mxu0 %v103
    %1445 = vmatprep.subr.mxu0 %v100
    %1446 = vmatpush1.msra.mxu0 %v99
    %1447 = vmatprep.subr.mxu0 %v96
    %1448 = vmatpush1.msra.mxu0 %v95
    %1449 = vmatprep.subr.mxu0 %v92
    %1450 = vmatpush1.msra.mxu0 %v91
    %1451 = vmatprep.subr.mxu0 %v88
    %1452 = vmatpush1.msra.mxu0 %v87
    %1453 = vmatprep.subr.mxu0 %v84
    %1454 = vmatpush1.msra.mxu0 %v83
    %1455 = vmatprep.subr.mxu0 %v80
    %1456 = vmatpush1.msra.mxu0 %v79
    %1457 = vmatprep.subr.mxu0 %v76
    %1458 = vmatpush1.msra.mxu0 %v75
    %1459 = vmatprep.subr.mxu0 %v72
    %1460 = vmatpush1.msra.mxu0 %v71
    %1461 = vmatprep.subr.mxu0 %v68
    %1462 = vmatpush1.msra.mxu0 %v67
    %1463 = vmatprep.subr.mxu0 0.0
    %1464 = vmatpush2.msra.mxu0 0.0
    %1465 = vmatprep.subr.mxu0 0.0
    %1466 = vmatpush2.msra.mxu0 0.0
    %1467 = vmatprep.subr.mxu0 0.0
    %1468 = vmatpush2.msra.mxu0 0.0
    %1469 = vmatprep.subr.mxu0 0.0
    %1470 = vmatpush2.msra.mxu0 0.0
    %1471 = vmatprep.subr.mxu0 0.0
    %1472 = vmatpush2.msra.mxu0 0.0
    %1473 = vmatprep.subr.mxu0 0.0
    %1474 = vmatpush2.msra.mxu0 0.0
    %1475 = vmatprep.subr.mxu0 0.0
    %1476 = vmatpush2.msra.mxu0 0.0
    %1477 = vmatprep.subr.mxu0 0.0
    %1478 = vmatpush2.msra.mxu0 0.0
    %1479 = vmatprep.subr.mxu0 0.0
    %1480 = vmatpush2.msra.mxu0 0.0
    %1481 = vmatprep.subr.mxu0 0.0
    %1482 = vmatpush2.msra.mxu0 0.0
    %1483 = vmatprep.subr.mxu0 0.0
    %1484 = vmatpush2.msra.mxu0 0.0
    %1485 = vmatprep.subr.mxu0 0.0
    %1486 = vmatpush2.msra.mxu0 0.0
    %1487 = vmatprep.subr.mxu0 0.0
    %1488 = vmatpush2.msra.mxu0 0.0
    %1489 = vmatprep.subr.mxu0 0.0
    %1490 = vmatpush2.msra.mxu0 0.0
    %1491 = vmatprep.subr.mxu0 0.0
    %1492 = vmatpush2.msra.mxu0 0.0
    %1493 = vmatprep.subr.mxu0 0.0
    %1494 = vmatpush2.msra.mxu0 0.0
    %1495 = vmatprep.mubr.f32.mxu0 0.0
    %1496 = vmatmul.mubr.f32.gmra.mxu0 %v1354
    %v1497 = vpop.f32.mrf.mxu0
    %v1498 = vadd.f32 0.0, %v1497
    %v1499 = vpop.f32.mrf.mxu0
    %v1500 = vadd.f32 0.0, %v1499
    %1501 = vdwg.mxu0
    %v1502 = vadd.f32 %v1356, %v1427
    %v1503 = vadd.f32 %v1357, %v1429
    %v1504 = vadd.f32 %v1358, %v1498
    %v1505 = vadd.f32 %v1359, %v1500
    %v1506 = vxor.u32 %v1502, 2147483648
    %v1507 = vmul.f32 %v1506, 1.442695
    %v1508 = vpow.pop %v1507
    %v1509 = vadd.f32 %v1508, 1.0
    %v1510 = vrcp.pop %v1509
    %v1511 = vmul.f32 1.0, %v1510
    %v1512 = vxor.u32 %v1503, 2147483648
    %v1513 = vmul.f32 %v1512, 1.442695
    %v1514 = vpow.pop %v1513
    %v1515 = vadd.f32 %v1514, 1.0
    %v1516 = vrcp.pop %v1515
    %v1517 = vmul.f32 1.0, %v1516
    %v1518 = vtanh.pop %v1504
    %v1519 = vxor.u32 %v1505, 2147483648
    %v1520 = vmul.f32 %v1519, 1.442695
    %v1521 = vpow.pop %v1520
    %v1522 = vadd.f32 %v1521, 1.0
    %v1523 = vrcp.pop %v1522
    %v1524 = vmul.f32 1.0, %v1523
    %v1525 = vmul.f32 %v1517, %v1352
    %v1526 = vmul.f32 %v1511, %v1518
    %v1527 = vadd.f32 %v1525, %v1526
    %v1528 = vtanh.pop %v1527
    %v1529 = vmul.f32 %v1524, %v1528
    %1530 = vst [vmem:[#allocation2] sm:$0xff] %v1529
    %1531 = vst [vmem:[#allocation3] sm:$0xff] %v1527
    // Predicated region
    $region38: #{tpu_custom_call.1} parent=1 // pred_check
      %p1532 = pneg %p59
    $region39: #{tpu_custom_call.1} parent=1 // pred_check_branch
      %1534 = sbr.rel (%p1532) target = $region41
    $region40: #{tpu_custom_call.1} parent=1 // pred_region
      %v1535 = vld [vmem:[%s2] sm:$0x1]
      %v1537 = vlaneseq
      %v1538 = vshrl.u32 %v1537, 7
      %v1539 = vsub.s32 0, %v1538
      %v1540 = vrot.slane %v1535, %v1539
      %v1542 = vmul.f32 %v1529, %v1540
      %1543 = vadd.xlane.f32.xlu0 %v1542
      %v1544 = vpop.xlane.xlu0 %1543
      %v1545 = vld [vmem:[#allocation8] sm:$0xff]
      %v1546 = vld [vmem:[%s4] sm:$0x1]
      %v1548 = vlaneseq
      %v1549 = vshrl.u32 %v1548, 7
      %v1550 = vsub.s32 0, %v1549
      %v1551 = vrot.slane %v1546, %v1550
      %v1553 = vmul.f32 %v1545, %v1551
      %1554 = vadd.xlane.f32.xlu0 %v1553
      %v1555 = vpop.xlane.xlu0 %1554
      %v1556 = vadd.f32 %v1544, %v1555
      %vm1557 = vcmask 7168
      %1558 = vst.msk [vmem:[%s5] sm:$0xff] %vm1557, %v1556
    $region41: #{tpu_custom_call.1} parent=1 // pred_fallthru
      _
    // Predicated region
    $region42: #{tpu_custom_call.1} parent=1 // pred_check
      _
    $region43: #{tpu_custom_call.1} parent=1 // pred_check_branch
      %1560 = sbr.rel (0) target = $region45
    $region44: #{tpu_custom_call.1} parent=1 // pred_region
      _
    $region45: #{tpu_custom_call.1} parent=1 // pred_fallthru
      _
    // Predicated region
    $region46: #{tpu_custom_call.1} parent=1 // pred_check
      _
    $region47: #{tpu_custom_call.1} parent=1 // pred_check_branch
      %1562 = sbr.rel (0) target = $region49
    $region48: #{tpu_custom_call.1} parent=1 // pred_region
      _
    $region49: #{tpu_custom_call.1} parent=1 // pred_fallthru
      _
    %1563 = vsyncpa [#allocation5], 1
    %1564 = vsyncpa [#allocation7], 1

</llo_original>
